<compile_context>
chip_gen: v7x
topology: tpu7x:2x2x1
jax: 0.10.0
libtpu: 0.0.40
codegen_flags: <defaults>
</compile_context>

<pallas_src>
import functools

import jax
import jax.numpy as jnp
from jax import lax
from jax.experimental import pallas as pl
from jax.experimental.pallas import tpu as pltpu

LANE = 128


def _round_up(v, m):
    return (v + m - 1) // m * m


def _fused_kernel(x_ref, wc_ref, bc_ref, wf_ref, bf_ref, logits_ref, feat_ref,
                  *, th, w, h, kh_sz, kw_sz, n_tiles, inv_hw):
    """Fused conv3x3 (im2col matmul per row tile) + bias + ReLU + avgpool + fc.

    x_ref     : (Hpad+2, W+2, Cin)   zero-padded NHWC input (Cin unpadded), bf16
    wc_ref    : (KH*KW*Cin, Cop)     im2col-repacked conv weight, bf16
    bc_ref    : (1, Cop)             conv bias, f32
    wf_ref    : (Cop, Np)            fc weight (transposed, lane padded), f32
    bf_ref    : (1, Np)              fc bias, f32
    logits_ref: (1, Np)              final model output row
    feat_ref  : (1, Cop)             avgpool-hook features row
    """
    cin = x_ref.shape[-1]
    cop = wc_ref.shape[-1]
    kk = kh_sz * kw_sz
    need_mask = (n_tiles * th != h)      # static: mask only if H % th != 0

    def tile_partial(row0):
        # One halo load of (th + KH - 1) rows, then fold all taps into a single
        # (th*W, KH*KW*Cin) im2col tile -> one MXU pass per row tile.
        slab = x_ref[pl.ds(row0, th + kh_sz - 1)]              # (th+2, W+2, Cin)
        cols = []
        for kh in range(kh_sz):
            for kw in range(kw_sz):
                cols.append(slab[kh:kh + th, kw:kw + w, :])    # (th, W, Cin)
        patches = jnp.concatenate(cols, axis=-1)               # (th, W, KK*Cin)
        patches = patches.reshape(th * w, kk * cin)
        acc = jnp.dot(patches, wc_ref[...],
                      preferred_element_type=jnp.float32)      # (th*W, Cop) f32
        conv = jnp.maximum(acc + bc_ref[...], 0.0)             # bias + ReLU
        if need_mask:
            row = lax.broadcasted_iota(jnp.int32, (th * w, 1), 0) // w + row0
            conv = jnp.where(row < h, conv, 0.0)               # drop pad rows
        return jnp.sum(conv, axis=0, keepdims=True)            # (1, Cop)

    if n_tiles == 1:
        feat_sum = tile_partial(0)
    else:
        feat_sum = lax.fori_loop(
            0, n_tiles,
            lambda t, s: s + tile_partial(pl.multiple_of(t * th, th)),
            jnp.zeros((1, cop), jnp.float32))

    feat = feat_sum * inv_hw                                    # global avg pool
    feat_ref[...] = feat
    logits_ref[...] = jnp.dot(feat, wf_ref[...],
                              preferred_element_type=jnp.float32) + bf_ref[...]


def model_with_features_forward(x_nchw, params, isda=False):
    """Equivalent of ModelWithFeatures.forward(x, isda)."""
    wconv, bconv, wfc, bfc = params          # PyTorch layouts:
    B, Cin, H, W = x_nchw.shape              #   wconv [Cout, Cin, KH, KW]
    Cout, _, KH, KW = wconv.shape            #   wfc   [Ncls, Cout]
    Ncls = wfc.shape[0]

    Cop = _round_up(Cout, LANE)
    Np = _round_up(Ncls, LANE)

    # Row tile: target ~256 matmul rows (fills the v6e/v7x 256x256 MXU M dim)
    # while keeping the f32 (th*W, Cop) conv tile a few hundred KiB.
    th = max(1, min(H, pl.cdiv(256, W)))
    n_tiles = pl.cdiv(H, th)
    Hpad = n_tiles * th

    # ---- glue (layout only): NCHW -> spatially padded NHWC, bf16.
    # Cin is kept UNPADDED so the dominant HBM stream is not inflated. ----
    x = jnp.transpose(x_nchw, (0, 2, 3, 1))
    xp = jnp.pad(x, ((0, 0), (1, 1 + Hpad - H), (1, 1), (0, 0))).astype(jnp.bfloat16)

    # conv weight -> im2col layout [KH*KW*Cin, Cop] matching the (kh, kw, cin)
    # patch concat order; Cout zero-padded to 128 (padded lanes contribute 0).
    wc = jnp.transpose(wconv, (2, 3, 1, 0)).reshape(KH * KW * Cin, Cout)
    wc = jnp.pad(wc, ((0, 0), (0, Cop - Cout))).astype(jnp.bfloat16)

    bc = jnp.pad(bconv.astype(jnp.float32), (0, Cop - Cout)).reshape(1, Cop)
    wf = jnp.pad(wfc.T.astype(jnp.float32), ((0, Cop - Cout), (0, Np - Ncls)))
    bf = jnp.pad(bfc.astype(jnp.float32), (0, Np - Ncls)).reshape(1, Np)

    kernel = functools.partial(
        _fused_kernel, th=th, w=W, h=H, kh_sz=KH, kw_sz=KW,
        n_tiles=n_tiles, inv_hw=1.0 / float(H * W))

    # Generation-aware VMEM budget: x block double-buffered, weights resident
    # once (constant index_map), plus live-value working set and headroom.
    x_blk = (Hpad + 2) * (W + 2) * Cin * 2
    w_bytes = KH * KW * Cin * Cop * 2 + Cop * 4 + Cop * Np * 4 + Np * 4
    out_blk = (Np + Cop) * 4
    work = th * W * (KH * KW * Cin * 2 + Cop * 4) * 2
    est = 2 * x_blk + 2 * w_bytes + 2 * out_blk + work + (2 << 20)
    try:
        vmem_cap = int(getattr(pltpu.get_tpu_info(), "vmem_capacity_bytes",
                               128 << 20))
    except Exception:  # conservative fallback
        vmem_cap = 64 << 20
    vmem_limit = int(min(max(est, 8 << 20), max(vmem_cap * 3 // 5, 16 << 20)))

    cost = pl.CostEstimate(
        flops=int(2 * B * H * W * KH * KW * Cin * Cout + 2 * B * Cout * Ncls),
        transcendentals=0,
        bytes_accessed=int(B * x_blk + w_bytes + B * out_blk))

    logits_p, feat_p = pl.pallas_call(
        kernel,
        out_shape=(jax.ShapeDtypeStruct((B, 1, Np), jnp.float32),
                   jax.ShapeDtypeStruct((B, 1, Cop), jnp.float32)),
        grid=(B,),
        in_specs=[
            # one batch element of the (small) padded image per grid step
            pl.BlockSpec((None, Hpad + 2, W + 2, Cin), lambda b: (b, 0, 0, 0)),
            pl.BlockSpec((KH * KW * Cin, Cop), lambda b: (0, 0)),
            pl.BlockSpec((1, Cop), lambda b: (0, 0)),
            pl.BlockSpec((Cop, Np), lambda b: (0, 0)),
            pl.BlockSpec((1, Np), lambda b: (0, 0)),
        ],
        out_specs=(
            pl.BlockSpec((None, 1, Np), lambda b: (b, 0, 0)),
            pl.BlockSpec((None, 1, Cop), lambda b: (b, 0, 0)),
        ),
        compiler_params=pltpu.CompilerParams(
            dimension_semantics=("parallel",),
            vmem_limit_bytes=vmem_limit),
        cost_estimate=cost,
    )(xp, wc, bc, wf, bf)

    logits = logits_p[:, 0, :Ncls]                       # strip lane padding
    if isda:
        # hook on avgpool captures its raw output shape [B, Cout, 1, 1]
        features = feat_p[:, 0, :Cout].reshape(B, Cout, 1, 1)
        return logits, features
    return logits


def _reference_forward(x_nchw, params):
    """Pure-JAX reference matched to the kernel's bf16 matmul inputs."""
    wconv, bconv, wfc, bfc = params
    B = x_nchw.shape[0]
    Cout = wconv.shape[0]
    x = jnp.transpose(x_nchw, (0, 2, 3, 1)).astype(jnp.bfloat16)      # NHWC
    w = jnp.transpose(wconv, (2, 3, 1, 0)).astype(jnp.bfloat16)       # HWIO
    conv = lax.conv_general_dilated(
        x, w, window_strides=(1, 1), padding="SAME",
        dimension_numbers=("NHWC", "HWIO", "NHWC"),
        preferred_element_type=jnp.float32)
    conv = jnp.maximum(conv + bconv.astype(jnp.float32), 0.0)
    feat = jnp.mean(conv, axis=(1, 2))                                # (B, Cout)
    logits = feat @ wfc.T.astype(jnp.float32) + bfc.astype(jnp.float32)
    return logits, feat.reshape(B, Cout, 1, 1)


if __name__ == "__main__":
    # Deterministic synthetic parameters & input (small shapes).
    B, Cin, H, W = 2, 4, 16, 16
    Cout, KH, KW = 32, 3, 3
    Ncls = 10

    key = jax.random.PRNGKey(0)
    k_x, k_wc, k_bc, k_wf, k_bf = jax.random.split(key, 5)

    x = jax.random.normal(k_x, (B, Cin, H, W), dtype=jnp.float32)
    wconv = jax.random.normal(k_wc, (Cout, Cin, KH, KW), dtype=jnp.float32) * 0.1
    bconv = jax.random.normal(k_bc, (Cout,), dtype=jnp.float32) * 0.1
    wfc = jax.random.normal(k_wf, (Ncls, Cout), dtype=jnp.float32) * 0.1
    bfc = jax.random.normal(k_bf, (Ncls,), dtype=jnp.float32) * 0.1
    params = (wconv, bconv, wfc, bfc)

    # isda=False path: only the final output.
    out = jax.block_until_ready(model_with_features_forward(x, params, isda=False))
    assert out.shape == (B, Ncls)

    # isda=True path: (final output, penultimate features from avgpool hook).
    logits, feats = model_with_features_forward(x, params, isda=True)
    logits = jax.block_until_ready(logits)
    feats = jax.block_until_ready(feats)
    assert logits.shape == (B, Ncls)
    assert feats.shape == (B, Cout, 1, 1)

    # Loose numerical check against a bf16-matched pure-JAX reference.
    ref_logits, ref_feats = _reference_forward(x, params)
    assert jnp.allclose(logits, ref_logits, rtol=1e-2, atol=1e-2), "logits mismatch"
    assert jnp.allclose(feats, ref_feats, rtol=1e-2, atol=1e-2), "features mismatch"

    print("KERNEL_OK")
</pallas_src>

<mosaic_0001>
module attributes {stable_mosaic.version = 11 : i64} {
  func.func @_fused_kernel(%arg0: i32, %arg1: memref<1x18x18x4xbf16, #tpu.memory_space<vmem>>, %arg2: memref<36x128xbf16, #tpu.memory_space<vmem>>, %arg3: memref<1x128xf32, #tpu.memory_space<vmem>>, %arg4: memref<128x128xf32, #tpu.memory_space<vmem>>, %arg5: memref<1x128xf32, #tpu.memory_space<vmem>>, %arg6: memref<1x1x128xf32, #tpu.memory_space<vmem>>, %arg7: memref<1x1x128xf32, #tpu.memory_space<vmem>>) attributes {dimension_semantics = [#tpu.dimension_semantics<parallel>], iteration_bounds = array<i64: 2>, scalar_prefetch = 0 : i64, scratch_operands = 0 : i64, tpu.core_type = #tpu.core_type<tc>, window_params = [{transform_indices = @transform_0, window_bounds = array<i64: 1, 18, 18, 4>}, {pipeline_mode = #tpu.pipeline_mode<synchronous>, transform_indices = @transform_1, window_bounds = array<i64: 36, 128>}, {pipeline_mode = #tpu.pipeline_mode<synchronous>, transform_indices = @transform_2, window_bounds = array<i64: 1, 128>}, {pipeline_mode = #tpu.pipeline_mode<synchronous>, transform_indices = @transform_3, window_bounds = array<i64: 128, 128>}, {pipeline_mode = #tpu.pipeline_mode<synchronous>, transform_indices = @transform_4, window_bounds = array<i64: 1, 128>}, {transform_indices = @transform_5, window_bounds = array<i64: 1, 1, 128>}, {transform_indices = @transform_6, window_bounds = array<i64: 1, 1, 128>}]} {
    %c0 = arith.constant 0 : index
    %c0_0 = arith.constant 0 : index
    %c0_1 = arith.constant 0 : index
    %c0_2 = arith.constant 0 : index
    %0 = vector.load %arg1[%c0, %c0_0, %c0_1, %c0_2] : memref<1x18x18x4xbf16, #tpu.memory_space<vmem>>, vector<1x18x18x4xbf16>
    %1 = vector.shape_cast %0 : vector<1x18x18x4xbf16> to vector<18x18x4xbf16>
    %2 = vector.extract_strided_slice %1 {offsets = [0, 0, 0], sizes = [16, 16, 4], strides = [1, 1, 1]} : vector<18x18x4xbf16> to vector<16x16x4xbf16>
    %3 = vector.extract_strided_slice %1 {offsets = [0, 1, 0], sizes = [16, 16, 4], strides = [1, 1, 1]} : vector<18x18x4xbf16> to vector<16x16x4xbf16>
    %4 = vector.extract_strided_slice %1 {offsets = [0, 2, 0], sizes = [16, 16, 4], strides = [1, 1, 1]} : vector<18x18x4xbf16> to vector<16x16x4xbf16>
    %5 = vector.extract_strided_slice %1 {offsets = [1, 0, 0], sizes = [16, 16, 4], strides = [1, 1, 1]} : vector<18x18x4xbf16> to vector<16x16x4xbf16>
    %6 = vector.extract_strided_slice %1 {offsets = [1, 1, 0], sizes = [16, 16, 4], strides = [1, 1, 1]} : vector<18x18x4xbf16> to vector<16x16x4xbf16>
    %7 = vector.extract_strided_slice %1 {offsets = [1, 2, 0], sizes = [16, 16, 4], strides = [1, 1, 1]} : vector<18x18x4xbf16> to vector<16x16x4xbf16>
    %8 = vector.extract_strided_slice %1 {offsets = [2, 0, 0], sizes = [16, 16, 4], strides = [1, 1, 1]} : vector<18x18x4xbf16> to vector<16x16x4xbf16>
    %9 = vector.extract_strided_slice %1 {offsets = [2, 1, 0], sizes = [16, 16, 4], strides = [1, 1, 1]} : vector<18x18x4xbf16> to vector<16x16x4xbf16>
    %10 = vector.extract_strided_slice %1 {offsets = [2, 2, 0], sizes = [16, 16, 4], strides = [1, 1, 1]} : vector<18x18x4xbf16> to vector<16x16x4xbf16>
    %11 = tpu.concatenate %2, %3, %4, %5, %6, %7, %8, %9, %10 in 2 : vector<16x16x4xbf16>, vector<16x16x4xbf16>, vector<16x16x4xbf16>, vector<16x16x4xbf16>, vector<16x16x4xbf16>, vector<16x16x4xbf16>, vector<16x16x4xbf16>, vector<16x16x4xbf16>, vector<16x16x4xbf16> -> vector<16x16x36xbf16>
    %12 = vector.shape_cast %11 : vector<16x16x36xbf16> to vector<256x36xbf16>
    %c0_3 = arith.constant 0 : index
    %c0_4 = arith.constant 0 : index
    %13 = vector.load %arg2[%c0_3, %c0_4] : memref<36x128xbf16, #tpu.memory_space<vmem>>, vector<36x128xbf16>
    %cst = arith.constant dense<0.000000e+00> : vector<256x128xf32>
    %14 = tpu.matmul %12, %13, %cst {dimension_numbers = #tpu.dot_dimension_numbers<[1], [0], [0], [1], [0, 0, 1, 1], [], []>} : vector<256x36xbf16>, vector<36x128xbf16>, vector<256x128xf32> -> vector<256x128xf32>
    %c0_5 = arith.constant 0 : index
    %c0_6 = arith.constant 0 : index
    %15 = vector.load %arg3[%c0_5, %c0_6] : memref<1x128xf32, #tpu.memory_space<vmem>>, vector<1x128xf32>
    %16 = vector.broadcast %15 : vector<1x128xf32> to vector<256x128xf32>
    %17 = arith.addf %14, %16 : vector<256x128xf32>
    %cst_7 = arith.constant 0.000000e+00 : f32
    %18 = vector.broadcast %cst_7 : f32 to vector<256x128xf32>
    %19 = arith.maximumf %17, %18 : vector<256x128xf32>
    %cst_8 = arith.constant dense<0.000000e+00> : vector<128xf32>
    %20 = vector.multi_reduction <add>, %19, %cst_8 [0] : vector<256x128xf32> to vector<128xf32>
    %21 = vector.shape_cast %20 : vector<128xf32> to vector<1x128xf32>
    %cst_9 = arith.constant 3.906250e-03 : f32
    %22 = vector.broadcast %cst_9 : f32 to vector<1x128xf32>
    %23 = arith.mulf %21, %22 : vector<1x128xf32>
    %c0_10 = arith.constant 0 : index
    %c0_11 = arith.constant 0 : index
    %c0_12 = arith.constant 0 : index
    %24 = vector.load %arg7[%c0_10, %c0_11, %c0_12] : memref<1x1x128xf32, #tpu.memory_space<vmem>>, vector<1x1x128xf32>
    %25 = vector.shape_cast %24 : vector<1x1x128xf32> to vector<1x128xf32>
    %26 = vector.shape_cast %23 : vector<1x128xf32> to vector<1x1x128xf32>
    tpu.vector_store %arg7[%c0_10, %c0_11, %c0_12], %26 {strides = array<i32>} : memref<1x1x128xf32, #tpu.memory_space<vmem>>, vector<1x1x128xf32>,
    %c0_13 = arith.constant 0 : index
    %c0_14 = arith.constant 0 : index
    %27 = vector.load %arg4[%c0_13, %c0_14] : memref<128x128xf32, #tpu.memory_space<vmem>>, vector<128x128xf32>
    %cst_15 = arith.constant dense<0.000000e+00> : vector<1x128xf32>
    %28 = tpu.matmul %23, %27, %cst_15 {dimension_numbers = #tpu.dot_dimension_numbers<[1], [0], [0], [1], [0, 0, 1, 1], [], []>} : vector<1x128xf32>, vector<128x128xf32>, vector<1x128xf32> -> vector<1x128xf32>
    %c0_16 = arith.constant 0 : index
    %c0_17 = arith.constant 0 : index
    %29 = vector.load %arg5[%c0_16, %c0_17] : memref<1x128xf32, #tpu.memory_space<vmem>>, vector<1x128xf32>
    %30 = arith.addf %28, %29 : vector<1x128xf32>
    %c0_18 = arith.constant 0 : index
    %c0_19 = arith.constant 0 : index
    %c0_20 = arith.constant 0 : index
    %31 = vector.load %arg6[%c0_18, %c0_19, %c0_20] : memref<1x1x128xf32, #tpu.memory_space<vmem>>, vector<1x1x128xf32>
    %32 = vector.shape_cast %31 : vector<1x1x128xf32> to vector<1x128xf32>
    %33 = vector.shape_cast %30 : vector<1x128xf32> to vector<1x1x128xf32>
    tpu.vector_store %arg6[%c0_18, %c0_19, %c0_20], %33 {strides = array<i32>} : memref<1x1x128xf32, #tpu.memory_space<vmem>>, vector<1x1x128xf32>,
    return
  }
  func.func @transform_0(%arg0: i32) -> (i32, i32, i32, i32) {
    %c0_i32 = arith.constant 0 : i32
    %c0_i32_0 = arith.constant 0 : i32
    %c0_i32_1 = arith.constant 0 : i32
    %c0_i32_2 = arith.constant 0 : i32
    return %arg0, %c0_i32, %c0_i32_0, %c0_i32_1 : i32, i32, i32, i32
  }
  func.func @transform_1(%arg0: i32) -> (i32, i32) {
    %c0_i32 = arith.constant 0 : i32
    %c0_i32_0 = arith.constant 0 : i32
    %c0_i32_1 = arith.constant 0 : i32
    return %c0_i32, %c0_i32_0 : i32, i32
  }
  func.func @transform_2(%arg0: i32) -> (i32, i32) {
    %c0_i32 = arith.constant 0 : i32
    %c0_i32_0 = arith.constant 0 : i32
    %c0_i32_1 = arith.constant 0 : i32
    return %c0_i32, %c0_i32_0 : i32, i32
  }
  func.func @transform_3(%arg0: i32) -> (i32, i32) {
    %c0_i32 = arith.constant 0 : i32
    %c0_i32_0 = arith.constant 0 : i32
    %c0_i32_1 = arith.constant 0 : i32
    return %c0_i32, %c0_i32_0 : i32, i32
  }
  func.func @transform_4(%arg0: i32) -> (i32, i32) {
    %c0_i32 = arith.constant 0 : i32
    %c0_i32_0 = arith.constant 0 : i32
    %c0_i32_1 = arith.constant 0 : i32
    return %c0_i32, %c0_i32_0 : i32, i32
  }
  func.func @transform_5(%arg0: i32) -> (i32, i32, i32) {
    %c0_i32 = arith.constant 0 : i32
    %c0_i32_0 = arith.constant 0 : i32
    %c0_i32_1 = arith.constant 0 : i32
    return %arg0, %c0_i32, %c0_i32_0 : i32, i32, i32
  }
  func.func @transform_6(%arg0: i32) -> (i32, i32, i32) {
    %c0_i32 = arith.constant 0 : i32
    %c0_i32_0 = arith.constant 0 : i32
    %c0_i32_1 = arith.constant 0 : i32
    return %arg0, %c0_i32, %c0_i32_0 : i32, i32, i32
  }
}

</mosaic_0001>

<llo_original>
// kernel: tpu_custom_call.1
$region0: #{tpu_custom_call.1}
  #allocation0 [shape = 'u32[]', space=smem, size = 0x4, offset = 0x4, fixed_abs, tag = 'smem constant byte address 0x4 - core index']
  #allocation1 [shape = 'u32[144,128]{1,0:T(1,128)}', space=vmem, size = 0x12000, scoped, tag = 'internal scratch']
  %s0 = inlined_call_operand.vmem [shape: bf16[2,18,18,4], index: 0, kind: input, shape index: {}]
  %s1 = inlined_call_operand.vmem [shape: bf16[36,128], index: 1, kind: input, shape index: {}]
  %s2 = inlined_call_operand.vmem [shape: f32[1,128], index: 2, kind: input, shape index: {}]
  %s3 = inlined_call_operand.vmem [shape: f32[128,128], index: 3, kind: input, shape index: {}]
  %s4 = inlined_call_operand.vmem [shape: f32[1,128], index: 4, kind: input, shape index: {}]
  %s5 = inlined_call_operand.hbm [shape: f32[2,1,128], index: 5, kind: output, shape index: {0}]
  %s6 = inlined_call_operand.hbm [shape: f32[2,1,128], index: 6, kind: output, shape index: {1}]
  %7 = xla_tuple %s5, %s6
  %s8 = sld [smem:[#allocation0]]
  $region61: #{tpu_custom_call.1} parent=0
    _
  %s10 = ssub.s32 1, %s8
  %s11 = scalar_select 0, %s10, %s8
  $region1: #{tpu_custom_call.1} parent=0
    #allocation2 [shape = 'u8[1024]{0}', space=vmem, size = 0x400, scoped, tag = 'output window, operand 0']
    #allocation3 [shape = 's32[2]{0}', space=sflag, size = 0x8, scoped, tag = 'scoped memory for tpu_custom_call.1']
    #allocation4 [shape = 'u8[1024]{0}', space=vmem, size = 0x400, scoped, tag = 'output window, operand 1']
    #allocation5 [shape = 's32[2]{0}', space=sflag, size = 0x8, scoped, tag = 'scoped memory for tpu_custom_call.1']
    %12 = vsyncpa [#allocation3], 0
    %s13 = scalar_lea.sflag [#allocation3], 1
    %14 = vsyncpa %s13, 0
    %15 = vsyncpa [#allocation5], 0
    %s16 = scalar_lea.sflag [#allocation5], 1
    %17 = vsyncpa %s16, 0
    loop: start=0, step=1, limit=4
    $region2: #{tpu_custom_call.1} parent=1 // loop_pre_header
      _
    $region3: #{tpu_custom_call.1} parent=1 // loop_header
      %s19 = sphi 0, %s23
      %p20 = scmp.ge.s32.totalorder %s19, 4
      %s29 = sphi 0, %s31
      %s32 = sphi 0, %s29
      %s33 = sphi 0, %s32
      %s49 = sphi 0, %s33
      %s53 = sphi 0, %s53
      %s55 = sphi 0, %s53
      %s56 = sphi 0, %s55
      %s70 = sphi 0, %s56
      %s74 = sphi 0, %s74
      %s76 = sphi 0, %s74
      %s77 = sphi 0, %s76
      %s91 = sphi 0, %s77
      %s95 = sphi 0, %s95
      %s97 = sphi 0, %s95
      %s98 = sphi 0, %s97
      %s112 = sphi 0, %s98
      %s116 = sphi 0, %s116
      %s118 = sphi 0, %s116
      %s119 = sphi 0, %s118
      %s133 = sphi 0, %s119
      %s139 = sphi 0, %s141
      %s142 = sphi 0, %s139
      %s143 = sphi 0, %s142
      %s159 = sphi 0, %s143
      %s165 = sphi 0, %s167
      %s168 = sphi 0, %s165
      %s169 = sphi 0, %s168
      %s185 = sphi 0, %s169
    $region4: #{tpu_custom_call.1} parent=1 // loop_header_branch
      %22 = sbr.rel (%p20) target = $region8
    $region5: #{tpu_custom_call.1} parent=1 // loop_body
      %s24 = ssub.s32 %s19, 1
      %s25 = ssub.s32 %s19, 2
      %s26 = sadd.s32 %s19, 1
      %s27 = ssub.s32 %s19, %s26
      %p28 = scmp.eq.s32.totalorder %s27, 0
      %s30 = sadd.s32 %s29, 1
      %s31 = scalar_select %p28, %s29, %s30
      %p34 = pneg %p28
      %p35 = scmp.eq.s32.totalorder %s19, 1
      %p36 = por %p34, %p35
      %p37 = scmp.ne.s32.totalorder %s29, %s32
      %p38 = scmp.eq.s32.totalorder %s19, 0
      %p39 = por %p37, %p38
      %p40 = scmp.ne.s32.totalorder %s29, %s32
      %p41 = scmp.eq.s32.totalorder %s24, 1
      %p42 = por %p40, %p41
      %p43 = scmp.ne.s32.totalorder %s32, %s33
      %p44 = scmp.eq.s32.totalorder %s24, 0
      %p45 = por %p43, %p44
      %p46 = scmp.ne.s32.totalorder %s32, %s33
      %p47 = scmp.eq.s32.totalorder %s25, 1
      %p48 = por %p46, %p47
      %p50 = scmp.ne.s32.totalorder %s33, %s49
      %p51 = scmp.eq.s32.totalorder %s25, 0
      %p52 = por %p50, %p51
      %s54 = sadd.s32 %s53, 1
      %p57 = scmp.eq.s32.totalorder %s19, 1
      %p58 = scmp.ne.s32.totalorder %s53, %s55
      %p59 = scmp.eq.s32.totalorder %s19, 0
      %p60 = por %p58, %p59
      %p61 = scmp.ne.s32.totalorder %s53, %s55
      %p62 = scmp.eq.s32.totalorder %s24, 1
      %p63 = por %p61, %p62
      %p64 = scmp.ne.s32.totalorder %s55, %s56
      %p65 = scmp.eq.s32.totalorder %s24, 0
      %p66 = por %p64, %p65
      %p67 = scmp.ne.s32.totalorder %s55, %s56
      %p68 = scmp.eq.s32.totalorder %s25, 1
      %p69 = por %p67, %p68
      %p71 = scmp.ne.s32.totalorder %s56, %s70
      %p72 = scmp.eq.s32.totalorder %s25, 0
      %p73 = por %p71, %p72
      %s75 = sadd.s32 %s74, 1
      %p78 = scmp.eq.s32.totalorder %s19, 1
      %p79 = scmp.ne.s32.totalorder %s74, %s76
      %p80 = scmp.eq.s32.totalorder %s19, 0
      %p81 = por %p79, %p80
      %p82 = scmp.ne.s32.totalorder %s74, %s76
      %p83 = scmp.eq.s32.totalorder %s24, 1
      %p84 = por %p82, %p83
      %p85 = scmp.ne.s32.totalorder %s76, %s77
      %p86 = scmp.eq.s32.totalorder %s24, 0
      %p87 = por %p85, %p86
      %p88 = scmp.ne.s32.totalorder %s76, %s77
      %p89 = scmp.eq.s32.totalorder %s25, 1
      %p90 = por %p88, %p89
      %p92 = scmp.ne.s32.totalorder %s77, %s91
      %p93 = scmp.eq.s32.totalorder %s25, 0
      %p94 = por %p92, %p93
      %s96 = sadd.s32 %s95, 1
      %p99 = scmp.eq.s32.totalorder %s19, 1
      %p100 = scmp.ne.s32.totalorder %s95, %s97
      %p101 = scmp.eq.s32.totalorder %s19, 0
      %p102 = por %p100, %p101
      %p103 = scmp.ne.s32.totalorder %s95, %s97
      %p104 = scmp.eq.s32.totalorder %s24, 1
      %p105 = por %p103, %p104
      %p106 = scmp.ne.s32.totalorder %s97, %s98
      %p107 = scmp.eq.s32.totalorder %s24, 0
      %p108 = por %p106, %p107
      %p109 = scmp.ne.s32.totalorder %s97, %s98
      %p110 = scmp.eq.s32.totalorder %s25, 1
      %p111 = por %p109, %p110
      %p113 = scmp.ne.s32.totalorder %s98, %s112
      %p114 = scmp.eq.s32.totalorder %s25, 0
      %p115 = por %p113, %p114
      %s117 = sadd.s32 %s116, 1
      %p120 = scmp.eq.s32.totalorder %s19, 1
      %p121 = scmp.ne.s32.totalorder %s116, %s118
      %p122 = scmp.eq.s32.totalorder %s19, 0
      %p123 = por %p121, %p122
      %p124 = scmp.ne.s32.totalorder %s116, %s118
      %p125 = scmp.eq.s32.totalorder %s24, 1
      %p126 = por %p124, %p125
      %p127 = scmp.ne.s32.totalorder %s118, %s119
      %p128 = scmp.eq.s32.totalorder %s24, 0
      %p129 = por %p127, %p128
      %p130 = scmp.ne.s32.totalorder %s118, %s119
      %p131 = scmp.eq.s32.totalorder %s25, 1
      %p132 = por %p130, %p131
      %p134 = scmp.ne.s32.totalorder %s119, %s133
      %p135 = scmp.eq.s32.totalorder %s25, 0
      %p136 = por %p134, %p135
      %s137 = ssub.s32 %s19, %s26
      %p138 = scmp.eq.s32.totalorder %s137, 0
      %s140 = sadd.s32 %s139, 1
      %s141 = scalar_select %p138, %s139, %s140
      %p144 = pneg %p138
      %p145 = scmp.eq.s32.totalorder %s19, 1
      %p146 = por %p144, %p145
      %p147 = scmp.ne.s32.totalorder %s139, %s142
      %p148 = scmp.eq.s32.totalorder %s19, 0
      %p149 = por %p147, %p148
      %p150 = scmp.ne.s32.totalorder %s139, %s142
      %p151 = scmp.eq.s32.totalorder %s24, 1
      %p152 = por %p150, %p151
      %p153 = scmp.ne.s32.totalorder %s142, %s143
      %p154 = scmp.eq.s32.totalorder %s24, 0
      %p155 = por %p153, %p154
      %p156 = scmp.ne.s32.totalorder %s142, %s143
      %p157 = scmp.eq.s32.totalorder %s25, 1
      %p158 = por %p156, %p157
      %p160 = scmp.ne.s32.totalorder %s143, %s159
      %p161 = scmp.eq.s32.totalorder %s25, 0
      %p162 = por %p160, %p161
      %s163 = ssub.s32 %s19, %s26
      %p164 = scmp.eq.s32.totalorder %s163, 0
      %s166 = sadd.s32 %s165, 1
      %s167 = scalar_select %p164, %s165, %s166
      %p170 = pneg %p164
      %p171 = scmp.eq.s32.totalorder %s19, 1
      %p172 = por %p170, %p171
      %p173 = scmp.ne.s32.totalorder %s165, %s168
      %p174 = scmp.eq.s32.totalorder %s19, 0
      %p175 = por %p173, %p174
      %p176 = scmp.ne.s32.totalorder %s165, %s168
      %p177 = scmp.eq.s32.totalorder %s24, 1
      %p178 = por %p176, %p177
      %p179 = scmp.ne.s32.totalorder %s168, %s169
      %p180 = scmp.eq.s32.totalorder %s24, 0
      %p181 = por %p179, %p180
      %p182 = scmp.ne.s32.totalorder %s168, %s169
      %p183 = scmp.eq.s32.totalorder %s25, 1
      %p184 = por %p182, %p183
      %p186 = scmp.ne.s32.totalorder %s169, %s185
      %p187 = scmp.eq.s32.totalorder %s25, 0
      %p188 = por %p186, %p187
      %p189 = scmp.le.s32.totalorder 1, %s19
      %p190 = scmp.lt.s32.totalorder %s19, 3
      %p191 = pnand %p189, %p190
      %p192 = pneg %p191
      // Predicated region
      $region9: #{tpu_custom_call.1} parent=5 // pred_check
        _
      $region10: #{tpu_custom_call.1} parent=5 // pred_check_branch
        %194 = sbr.rel (%p191) target = $region12
      $region11: #{tpu_custom_call.1} parent=5 // pred_region
        %s195 = ssub.s32 %s19, 1
        // Predicated region
        $region13: #{tpu_custom_call.1} parent=11 // pred_check
          %p196 = pneg %p66
        $region14: #{tpu_custom_call.1} parent=11 // pred_check_branch
          %198 = sbr.rel (%p196) target = $region16
        $region15: #{tpu_custom_call.1} parent=11 // pred_region
          _
        $region16: #{tpu_custom_call.1} parent=11 // pred_fallthru
          _
        // Predicated region
        $region17: #{tpu_custom_call.1} parent=11 // pred_check
          %p199 = pneg %p87
        $region18: #{tpu_custom_call.1} parent=11 // pred_check_branch
          %201 = sbr.rel (%p199) target = $region20
        $region19: #{tpu_custom_call.1} parent=11 // pred_region
          _
        $region20: #{tpu_custom_call.1} parent=11 // pred_fallthru
          _
        // Predicated region
        $region21: #{tpu_custom_call.1} parent=11 // pred_check
          %p202 = pneg %p108
        $region22: #{tpu_custom_call.1} parent=11 // pred_check_branch
          %204 = sbr.rel (%p202) target = $region24
        $region23: #{tpu_custom_call.1} parent=11 // pred_region
          _
        $region24: #{tpu_custom_call.1} parent=11 // pred_fallthru
          _
        // Predicated region
        $region25: #{tpu_custom_call.1} parent=11 // pred_check
          %p205 = pneg %p129
        $region26: #{tpu_custom_call.1} parent=11 // pred_check_branch
          %207 = sbr.rel (%p205) target = $region28
        $region27: #{tpu_custom_call.1} parent=11 // pred_region
          _
        $region28: #{tpu_custom_call.1} parent=11 // pred_fallthru
          _
      $region12: #{tpu_custom_call.1} parent=5 // pred_fallthru
        _
      %p208 = scmp.lt.s32.totalorder %s19, 2
      // Predicated region
      $region29: #{tpu_custom_call.1} parent=5 // pred_check
        %p209 = pneg %p208
      $region30: #{tpu_custom_call.1} parent=5 // pred_check_branch
        %211 = sbr.rel (%p209) target = $region32
      $region31: #{tpu_custom_call.1} parent=5 // pred_region
        // Predicated region
        $region33: #{tpu_custom_call.1} parent=31 // pred_check
          %p212 = pneg %p39
        $region34: #{tpu_custom_call.1} parent=31 // pred_check_branch
          %214 = sbr.rel (%p212) target = $region36
        $region35: #{tpu_custom_call.1} parent=31 // pred_region
          %p215 = scmp.lt.s32.totalorder %s19, 1
          %s216 = scalar_select %p215, %s19, 1
          %s217 = smul.addr %s216, 54
          %s218 = smul.addr %s217, 4
          %s219 = scalar_lea.vmem %s0, %s218
        $region36: #{tpu_custom_call.1} parent=31 // pred_fallthru
          _
      $region32: #{tpu_custom_call.1} parent=5 // pred_fallthru
        _
      %p220 = scmp.le.s32.totalorder 1, %s19
      %p221 = scmp.lt.s32.totalorder %s19, 3
      %p222 = pnand %p220, %p221
      %p223 = pneg %p222
      // Predicated region
      $region37: #{tpu_custom_call.1} parent=5 // pred_check
        _
      $region38: #{tpu_custom_call.1} parent=5 // pred_check_branch
        %225 = sbr.rel (%p222) target = $region40
      $region39: #{tpu_custom_call.1} parent=5 // pred_region
        %s226 = ssub.s32 %s19, 1
        %p227 = scmp.lt.s32.totalorder %s24, 1
        %s228 = scalar_select %p227, %s24, 1
        %s229 = smul.addr %s228, 54
        %s230 = smul.addr %s229, 4
        %s231 = scalar_lea.vmem %s0, %s230
        %p232 = pneg %p45
        %p233 = pneg %p42
        %p234 = pneg %p66
        %p235 = pneg %p63
        %p236 = pneg %p87
        %p237 = pneg %p84
        %p238 = pneg %p108
        %p239 = pneg %p105
        %p240 = pneg %p129
        %p241 = pneg %p126
        %p242 = pneg %p155
        %p243 = pneg %p152
        %s244 = sand.u32 %s142, 1
        %s245 = scalar_lea.sflag [#allocation3], %s244
        %s246 = sand.u32 %s142, 1
        %s247 = scalar_lea.vmem [#allocation2], %s246
        %p248 = pneg %p181
        %p249 = pneg %p178
        %s250 = sand.u32 %s168, 1
        %s251 = scalar_lea.sflag [#allocation5], %s250
        %s252 = sand.u32 %s168, 1
        %s253 = scalar_lea.vmem [#allocation4], %s252
        %p254 = scmp.lt.s32.totalorder %s24, 1
        %s255 = scalar_select %p254, %s24, 1
        %s256 = smul.addr %s255, 54
        %s257 = smul.addr %s256, 4
        %s258 = scalar_lea.vmem %s0, %s257
        %v260 = vld [vmem:[%s258] sm:$0xf]
        %v261 = vld [vmem:[%s258 + $0x4] sm:$0xf]
        %v262 = vld [vmem:[%s258 + $0x8] sm:$0x1]
        %v263 = vld [vmem:[%s258 + $0xc] sm:$0xf]
        %v264 = vld [vmem:[%s258 + $0x10] sm:$0xf]
        %v265 = vld [vmem:[%s258 + $0x14] sm:$0x1]
        %v266 = vld [vmem:[%s258 + $0x18] sm:$0xf]
        %v267 = vld [vmem:[%s258 + $0x1c] sm:$0xf]
        %v268 = vld [vmem:[%s258 + $0x20] sm:$0x1]
        %v269 = vld [vmem:[%s258 + $0x24] sm:$0xf]
        %v270 = vld [vmem:[%s258 + $0x28] sm:$0xf]
        %v271 = vld [vmem:[%s258 + $0x2c] sm:$0x1]
        %v272 = vld [vmem:[%s258 + $0x30] sm:$0xf]
        %v273 = vld [vmem:[%s258 + $0x34] sm:$0xf]
        %v274 = vld [vmem:[%s258 + $0x38] sm:$0x1]
        %v275 = vld [vmem:[%s258 + $0x3c] sm:$0xf]
        %v276 = vld [vmem:[%s258 + $0x40] sm:$0xf]
        %v277 = vld [vmem:[%s258 + $0x44] sm:$0x1]
        %v278 = vld [vmem:[%s258 + $0x48] sm:$0xf]
        %v279 = vld [vmem:[%s258 + $0x4c] sm:$0xf]
        %v280 = vld [vmem:[%s258 + $0x50] sm:$0x1]
        %v281 = vld [vmem:[%s258 + $0x54] sm:$0xf]
        %v282 = vld [vmem:[%s258 + $0x58] sm:$0xf]
        %v283 = vld [vmem:[%s258 + $0x5c] sm:$0x1]
        %v284 = vld [vmem:[%s258 + $0x60] sm:$0xf]
        %v285 = vld [vmem:[%s258 + $0x64] sm:$0xf]
        %v286 = vld [vmem:[%s258 + $0x68] sm:$0x1]
        %v287 = vld [vmem:[%s258 + $0x6c] sm:$0xf]
        %v288 = vld [vmem:[%s258 + $0x70] sm:$0xf]
        %v289 = vld [vmem:[%s258 + $0x74] sm:$0x1]
        %v290 = vld [vmem:[%s258 + $0x78] sm:$0xf]
        %v291 = vld [vmem:[%s258 + $0x7c] sm:$0xf]
        %v292 = vld [vmem:[%s258 + $0x80] sm:$0x1]
        %v293 = vld [vmem:[%s258 + $0x84] sm:$0xf]
        %v294 = vld [vmem:[%s258 + $0x88] sm:$0xf]
        %v295 = vld [vmem:[%s258 + $0x8c] sm:$0x1]
        %v296 = vld [vmem:[%s258 + $0x90] sm:$0xf]
        %v297 = vld [vmem:[%s258 + $0x94] sm:$0xf]
        %v298 = vld [vmem:[%s258 + $0x98] sm:$0x1]
        %v299 = vld [vmem:[%s258 + $0x9c] sm:$0xf]
        %v300 = vld [vmem:[%s258 + $0xa0] sm:$0xf]
        %v301 = vld [vmem:[%s258 + $0xa4] sm:$0x1]
        %v302 = vld [vmem:[%s258 + $0xa8] sm:$0xf]
        %v303 = vld [vmem:[%s258 + $0xac] sm:$0xf]
        %v304 = vld [vmem:[%s258 + $0xb0] sm:$0x1]
        %v305 = vld [vmem:[%s258 + $0xb4] sm:$0xf]
        %v306 = vld [vmem:[%s258 + $0xb8] sm:$0xf]
        %v307 = vld [vmem:[%s258 + $0xbc] sm:$0x1]
        %v308 = vld [vmem:[%s258 + $0xc0] sm:$0xf]
        %v309 = vld [vmem:[%s258 + $0xc4] sm:$0xf]
        %v310 = vld [vmem:[%s258 + $0xc8] sm:$0x1]
        %v311 = vld [vmem:[%s258 + $0xcc] sm:$0xf]
        %v312 = vld [vmem:[%s258 + $0xd0] sm:$0xf]
        %v313 = vld [vmem:[%s258 + $0xd4] sm:$0x1]
        %v346 = vunpack.c.l.b16 %v260
        %v347 = vunpack.c.l.b16 %v261
        %v348 = vunpack.c.l.b16 %v263
        %v349 = vunpack.c.l.b16 %v264
        %v350 = vunpack.c.l.b16 %v266
        %v351 = vunpack.c.l.b16 %v267
        %v352 = vunpack.c.l.b16 %v269
        %v353 = vunpack.c.l.b16 %v270
        %v354 = vunpack.c.l.b16 %v272
        %v355 = vunpack.c.l.b16 %v273
        %v356 = vunpack.c.l.b16 %v275
        %v357 = vunpack.c.l.b16 %v276
        %v358 = vunpack.c.l.b16 %v278
        %v359 = vunpack.c.l.b16 %v279
        %v360 = vunpack.c.l.b16 %v281
        %v361 = vunpack.c.l.b16 %v282
        %v362 = vunpack.c.l.b16 %v284
        %v363 = vunpack.c.l.b16 %v285
        %v364 = vunpack.c.l.b16 %v287
        %v365 = vunpack.c.l.b16 %v288
        %v366 = vunpack.c.l.b16 %v290
        %v367 = vunpack.c.l.b16 %v291
        %v368 = vunpack.c.l.b16 %v293
        %v369 = vunpack.c.l.b16 %v294
        %v370 = vunpack.c.l.b16 %v296
        %v371 = vunpack.c.l.b16 %v297
        %v372 = vunpack.c.l.b16 %v299
        %v373 = vunpack.c.l.b16 %v300
        %v374 = vunpack.c.l.b16 %v302
        %v375 = vunpack.c.l.b16 %v303
        %v376 = vunpack.c.l.b16 %v305
        %v377 = vunpack.c.l.b16 %v306
        %v378 = vpack.c.b16 %v347, %v346
        %v379 = vpack.c.b16 %v349, %v348
        %v380 = vpack.c.b16 %v351, %v350
        %v381 = vpack.c.b16 %v353, %v352
        %v382 = vpack.c.b16 %v355, %v354
        %v383 = vpack.c.b16 %v357, %v356
        %v384 = vpack.c.b16 %v359, %v358
        %v385 = vpack.c.b16 %v361, %v360
        %v386 = vpack.c.b16 %v363, %v362
        %v387 = vpack.c.b16 %v365, %v364
        %v388 = vpack.c.b16 %v367, %v366
        %v389 = vpack.c.b16 %v369, %v368
        %v390 = vpack.c.b16 %v371, %v370
        %v391 = vpack.c.b16 %v373, %v372
        %v392 = vpack.c.b16 %v375, %v374
        %v393 = vpack.c.b16 %v377, %v376
        %v410 = vunpack.c.l.b16 %v262
        %v411 = vunpack.c.l.b16 %v265
        %v412 = vunpack.c.l.b16 %v268
        %v413 = vunpack.c.l.b16 %v271
        %v414 = vunpack.c.l.b16 %v274
        %v415 = vunpack.c.l.b16 %v277
        %v416 = vunpack.c.l.b16 %v280
        %v417 = vunpack.c.l.b16 %v283
        %v418 = vunpack.c.l.b16 %v286
        %v419 = vunpack.c.l.b16 %v289
        %v420 = vunpack.c.l.b16 %v292
        %v421 = vunpack.c.l.b16 %v295
        %v422 = vunpack.c.l.b16 %v298
        %v423 = vunpack.c.l.b16 %v301
        %v424 = vunpack.c.l.b16 %v304
        %v425 = vunpack.c.l.b16 %v307
        %v426 = vpack.c.b16 %v410, %v410
        %v427 = vpack.c.b16 %v411, %v411
        %v428 = vpack.c.b16 %v412, %v412
        %v429 = vpack.c.b16 %v413, %v413
        %v430 = vpack.c.b16 %v414, %v414
        %v431 = vpack.c.b16 %v415, %v415
        %v432 = vpack.c.b16 %v416, %v416
        %v433 = vpack.c.b16 %v417, %v417
        %v434 = vpack.c.b16 %v418, %v418
        %v435 = vpack.c.b16 %v419, %v419
        %v436 = vpack.c.b16 %v420, %v420
        %v437 = vpack.c.b16 %v421, %v421
        %v438 = vpack.c.b16 %v422, %v422
        %v439 = vpack.c.b16 %v423, %v423
        %v440 = vpack.c.b16 %v424, %v424
        %v441 = vpack.c.b16 %v425, %v425
        %vm442 = vsmask.f32 7424
        %v444 = vshrl.u32 %v378, 16
        %v446 = vshll.u32 %v378, 16
        %v448 = vrot.slane %v446, 1
        %v449 = vor.u32 %v444, %v448
        %v451 = vshll.u32 %v426, 16
        %v453 = vrot.slane %v451, 1
        %v454 = vsel %vm442, %v449, %v453
        %v456 = vshrl.u32 %v379, 16
        %v458 = vshll.u32 %v379, 16
        %v460 = vrot.slane %v458, 1
        %v461 = vor.u32 %v456, %v460
        %v463 = vshll.u32 %v427, 16
        %v465 = vrot.slane %v463, 1
        %v466 = vsel %vm442, %v461, %v465
        %v468 = vshrl.u32 %v380, 16
        %v470 = vshll.u32 %v380, 16
        %v472 = vrot.slane %v470, 1
        %v473 = vor.u32 %v468, %v472
        %v475 = vshll.u32 %v428, 16
        %v477 = vrot.slane %v475, 1
        %v478 = vsel %vm442, %v473, %v477
        %v480 = vshrl.u32 %v381, 16
        %v482 = vshll.u32 %v381, 16
        %v484 = vrot.slane %v482, 1
        %v485 = vor.u32 %v480, %v484
        %v487 = vshll.u32 %v429, 16
        %v489 = vrot.slane %v487, 1
        %v490 = vsel %vm442, %v485, %v489
        %v492 = vshrl.u32 %v382, 16
        %v494 = vshll.u32 %v382, 16
        %v496 = vrot.slane %v494, 1
        %v497 = vor.u32 %v492, %v496
        %v499 = vshll.u32 %v430, 16
        %v501 = vrot.slane %v499, 1
        %v502 = vsel %vm442, %v497, %v501
        %v504 = vshrl.u32 %v383, 16
        %v506 = vshll.u32 %v383, 16
        %v508 = vrot.slane %v506, 1
        %v509 = vor.u32 %v504, %v508
        %v511 = vshll.u32 %v431, 16
        %v513 = vrot.slane %v511, 1
        %v514 = vsel %vm442, %v509, %v513
        %v516 = vshrl.u32 %v384, 16
        %v518 = vshll.u32 %v384, 16
        %v520 = vrot.slane %v518, 1
        %v521 = vor.u32 %v516, %v520
        %v523 = vshll.u32 %v432, 16
        %v525 = vrot.slane %v523, 1
        %v526 = vsel %vm442, %v521, %v525
        %v528 = vshrl.u32 %v385, 16
        %v530 = vshll.u32 %v385, 16
        %v532 = vrot.slane %v530, 1
        %v533 = vor.u32 %v528, %v532
        %v535 = vshll.u32 %v433, 16
        %v537 = vrot.slane %v535, 1
        %v538 = vsel %vm442, %v533, %v537
        %v540 = vshrl.u32 %v386, 16
        %v542 = vshll.u32 %v386, 16
        %v544 = vrot.slane %v542, 1
        %v545 = vor.u32 %v540, %v544
        %v547 = vshll.u32 %v434, 16
        %v549 = vrot.slane %v547, 1
        %v550 = vsel %vm442, %v545, %v549
        %v552 = vshrl.u32 %v387, 16
        %v554 = vshll.u32 %v387, 16
        %v556 = vrot.slane %v554, 1
        %v557 = vor.u32 %v552, %v556
        %v559 = vshll.u32 %v435, 16
        %v561 = vrot.slane %v559, 1
        %v562 = vsel %vm442, %v557, %v561
        %v564 = vshrl.u32 %v388, 16
        %v566 = vshll.u32 %v388, 16
        %v568 = vrot.slane %v566, 1
        %v569 = vor.u32 %v564, %v568
        %v571 = vshll.u32 %v436, 16
        %v573 = vrot.slane %v571, 1
        %v574 = vsel %vm442, %v569, %v573
        %v576 = vshrl.u32 %v389, 16
        %v578 = vshll.u32 %v389, 16
        %v580 = vrot.slane %v578, 1
        %v581 = vor.u32 %v576, %v580
        %v583 = vshll.u32 %v437, 16
        %v585 = vrot.slane %v583, 1
        %v586 = vsel %vm442, %v581, %v585
        %v588 = vshrl.u32 %v390, 16
        %v590 = vshll.u32 %v390, 16
        %v592 = vrot.slane %v590, 1
        %v593 = vor.u32 %v588, %v592
        %v595 = vshll.u32 %v438, 16
        %v597 = vrot.slane %v595, 1
        %v598 = vsel %vm442, %v593, %v597
        %v600 = vshrl.u32 %v391, 16
        %v602 = vshll.u32 %v391, 16
        %v604 = vrot.slane %v602, 1
        %v605 = vor.u32 %v600, %v604
        %v607 = vshll.u32 %v439, 16
        %v609 = vrot.slane %v607, 1
        %v610 = vsel %vm442, %v605, %v609
        %v612 = vshrl.u32 %v392, 16
        %v614 = vshll.u32 %v392, 16
        %v616 = vrot.slane %v614, 1
        %v617 = vor.u32 %v612, %v616
        %v619 = vshll.u32 %v440, 16
        %v621 = vrot.slane %v619, 1
        %v622 = vsel %vm442, %v617, %v621
        %v624 = vshrl.u32 %v393, 16
        %v626 = vshll.u32 %v393, 16
        %v628 = vrot.slane %v626, 1
        %v629 = vor.u32 %v624, %v628
        %v631 = vshll.u32 %v441, 16
        %v633 = vrot.slane %v631, 1
        %v634 = vsel %vm442, %v629, %v633
        %635 = vrot.lane.b32.xlu0 %v454, 4
        %v636 = vpop.permute.xlu0 %635
        %637 = vrot.lane.b32.xlu0 %v466, 4
        %v638 = vpop.permute.xlu0 %637
        %639 = vrot.lane.b32.xlu0 %v478, 4
        %v640 = vpop.permute.xlu0 %639
        %641 = vrot.lane.b32.xlu0 %v490, 4
        %v642 = vpop.permute.xlu0 %641
        %643 = vrot.lane.b32.xlu0 %v502, 4
        %v644 = vpop.permute.xlu0 %643
        %645 = vrot.lane.b32.xlu0 %v514, 4
        %v646 = vpop.permute.xlu0 %645
        %647 = vrot.lane.b32.xlu0 %v526, 4
        %v648 = vpop.permute.xlu0 %647
        %649 = vrot.lane.b32.xlu0 %v538, 4
        %v650 = vpop.permute.xlu0 %649
        %651 = vrot.lane.b32.xlu0 %v550, 4
        %v652 = vpop.permute.xlu0 %651
        %653 = vrot.lane.b32.xlu0 %v562, 4
        %v654 = vpop.permute.xlu0 %653
        %655 = vrot.lane.b32.xlu0 %v574, 4
        %v656 = vpop.permute.xlu0 %655
        %657 = vrot.lane.b32.xlu0 %v586, 4
        %v658 = vpop.permute.xlu0 %657
        %659 = vrot.lane.b32.xlu0 %v598, 4
        %v660 = vpop.permute.xlu0 %659
        %661 = vrot.lane.b32.xlu0 %v610, 4
        %v662 = vpop.permute.xlu0 %661
        %663 = vrot.lane.b32.xlu0 %v622, 4
        %v664 = vpop.permute.xlu0 %663
        %665 = vrot.lane.b32.xlu0 %v634, 4
        %v666 = vpop.permute.xlu0 %665
        %vm667 = vcmask 1046528
        %v668 = vrot.slane %v378, 1
        %v669 = vrot.slane %v426, 1
        %v670 = vsel %vm667, %v668, %v669
        %v671 = vrot.slane %v379, 1
        %v672 = vrot.slane %v427, 1
        %v673 = vsel %vm667, %v671, %v672
        %v674 = vrot.slane %v380, 1
        %v675 = vrot.slane %v428, 1
        %v676 = vsel %vm667, %v674, %v675
        %v677 = vrot.slane %v381, 1
        %v678 = vrot.slane %v429, 1
        %v679 = vsel %vm667, %v677, %v678
        %v680 = vrot.slane %v382, 1
        %v681 = vrot.slane %v430, 1
        %v682 = vsel %vm667, %v680, %v681
        %v683 = vrot.slane %v383, 1
        %v684 = vrot.slane %v431, 1
        %v685 = vsel %vm667, %v683, %v684
        %v686 = vrot.slane %v384, 1
        %v687 = vrot.slane %v432, 1
        %v688 = vsel %vm667, %v686, %v687
        %v689 = vrot.slane %v385, 1
        %v690 = vrot.slane %v433, 1
        %v691 = vsel %vm667, %v689, %v690
        %v692 = vrot.slane %v386, 1
        %v693 = vrot.slane %v434, 1
        %v694 = vsel %vm667, %v692, %v693
        %v695 = vrot.slane %v387, 1
        %v696 = vrot.slane %v435, 1
        %v697 = vsel %vm667, %v695, %v696
        %v698 = vrot.slane %v388, 1
        %v699 = vrot.slane %v436, 1
        %v700 = vsel %vm667, %v698, %v699
        %v701 = vrot.slane %v389, 1
        %v702 = vrot.slane %v437, 1
        %v703 = vsel %vm667, %v701, %v702
        %v704 = vrot.slane %v390, 1
        %v705 = vrot.slane %v438, 1
        %v706 = vsel %vm667, %v704, %v705
        %v707 = vrot.slane %v391, 1
        %v708 = vrot.slane %v439, 1
        %v709 = vsel %vm667, %v707, %v708
        %v710 = vrot.slane %v392, 1
        %v711 = vrot.slane %v440, 1
        %v712 = vsel %vm667, %v710, %v711
        %v713 = vrot.slane %v393, 1
        %v714 = vrot.slane %v441, 1
        %v715 = vsel %vm667, %v713, %v714
        %716 = vrot.lane.b32.xlu0 %v670, 8
        %v717 = vpop.permute.xlu0 %716
        %718 = vrot.lane.b32.xlu0 %v673, 8
        %v719 = vpop.permute.xlu0 %718
        %720 = vrot.lane.b32.xlu0 %v676, 8
        %v721 = vpop.permute.xlu0 %720
        %722 = vrot.lane.b32.xlu0 %v679, 8
        %v723 = vpop.permute.xlu0 %722
        %724 = vrot.lane.b32.xlu0 %v682, 8
        %v725 = vpop.permute.xlu0 %724
        %726 = vrot.lane.b32.xlu0 %v685, 8
        %v727 = vpop.permute.xlu0 %726
        %728 = vrot.lane.b32.xlu0 %v688, 8
        %v729 = vpop.permute.xlu0 %728
        %730 = vrot.lane.b32.xlu0 %v691, 8
        %v731 = vpop.permute.xlu0 %730
        %732 = vrot.lane.b32.xlu0 %v694, 8
        %v733 = vpop.permute.xlu0 %732
        %734 = vrot.lane.b32.xlu0 %v697, 8
        %v735 = vpop.permute.xlu0 %734
        %736 = vrot.lane.b32.xlu0 %v700, 8
        %v737 = vpop.permute.xlu0 %736
        %738 = vrot.lane.b32.xlu0 %v703, 8
        %v739 = vpop.permute.xlu0 %738
        %740 = vrot.lane.b32.xlu0 %v706, 8
        %v741 = vpop.permute.xlu0 %740
        %742 = vrot.lane.b32.xlu0 %v709, 8
        %v743 = vpop.permute.xlu0 %742
        %744 = vrot.lane.b32.xlu0 %v712, 8
        %v745 = vpop.permute.xlu0 %744
        %746 = vrot.lane.b32.xlu0 %v715, 8
        %v747 = vpop.permute.xlu0 %746
        %v750 = vunpack.c.l.b16 %v308
        %v751 = vunpack.c.l.b16 %v309
        %v752 = vpack.c.b16 %v751, %v750
        %753 = vrot.lane.b32.xlu0 %v379, 12
        %v754 = vpop.permute.xlu0 %753
        %755 = vrot.lane.b32.xlu0 %v380, 12
        %v756 = vpop.permute.xlu0 %755
        %757 = vrot.lane.b32.xlu0 %v381, 12
        %v758 = vpop.permute.xlu0 %757
        %759 = vrot.lane.b32.xlu0 %v382, 12
        %v760 = vpop.permute.xlu0 %759
        %761 = vrot.lane.b32.xlu0 %v383, 12
        %v762 = vpop.permute.xlu0 %761
        %763 = vrot.lane.b32.xlu0 %v384, 12
        %v764 = vpop.permute.xlu0 %763
        %765 = vrot.lane.b32.xlu0 %v385, 12
        %v766 = vpop.permute.xlu0 %765
        %767 = vrot.lane.b32.xlu0 %v386, 12
        %v768 = vpop.permute.xlu0 %767
        %769 = vrot.lane.b32.xlu0 %v387, 12
        %v770 = vpop.permute.xlu0 %769
        %771 = vrot.lane.b32.xlu0 %v388, 12
        %v772 = vpop.permute.xlu0 %771
        %773 = vrot.lane.b32.xlu0 %v389, 12
        %v774 = vpop.permute.xlu0 %773
        %775 = vrot.lane.b32.xlu0 %v390, 12
        %v776 = vpop.permute.xlu0 %775
        %777 = vrot.lane.b32.xlu0 %v391, 12
        %v778 = vpop.permute.xlu0 %777
        %779 = vrot.lane.b32.xlu0 %v392, 12
        %v780 = vpop.permute.xlu0 %779
        %781 = vrot.lane.b32.xlu0 %v393, 12
        %v782 = vpop.permute.xlu0 %781
        %783 = vrot.lane.b32.xlu0 %v752, 12
        %v784 = vpop.permute.xlu0 %783
        %v786 = vunpack.c.l.b16 %v310
        %v787 = vpack.c.b16 %v786, %v786
        %v789 = vshrl.u32 %v752, 16
        %v791 = vshll.u32 %v752, 16
        %v793 = vrot.slane %v791, 1
        %v794 = vor.u32 %v789, %v793
        %v796 = vshll.u32 %v787, 16
        %v798 = vrot.slane %v796, 1
        %v799 = vsel %vm442, %v794, %v798
        %800 = vrot.lane.b32.xlu0 %v466, 16
        %v801 = vpop.permute.xlu0 %800
        %802 = vrot.lane.b32.xlu0 %v478, 16
        %v803 = vpop.permute.xlu0 %802
        %804 = vrot.lane.b32.xlu0 %v490, 16
        %v805 = vpop.permute.xlu0 %804
        %806 = vrot.lane.b32.xlu0 %v502, 16
        %v807 = vpop.permute.xlu0 %806
        %808 = vrot.lane.b32.xlu0 %v514, 16
        %v809 = vpop.permute.xlu0 %808
        %810 = vrot.lane.b32.xlu0 %v526, 16
        %v811 = vpop.permute.xlu0 %810
        %812 = vrot.lane.b32.xlu0 %v538, 16
        %v813 = vpop.permute.xlu0 %812
        %814 = vrot.lane.b32.xlu0 %v550, 16
        %v815 = vpop.permute.xlu0 %814
        %816 = vrot.lane.b32.xlu0 %v562, 16
        %v817 = vpop.permute.xlu0 %816
        %818 = vrot.lane.b32.xlu0 %v574, 16
        %v819 = vpop.permute.xlu0 %818
        %820 = vrot.lane.b32.xlu0 %v586, 16
        %v821 = vpop.permute.xlu0 %820
        %822 = vrot.lane.b32.xlu0 %v598, 16
        %v823 = vpop.permute.xlu0 %822
        %824 = vrot.lane.b32.xlu0 %v610, 16
        %v825 = vpop.permute.xlu0 %824
        %826 = vrot.lane.b32.xlu0 %v622, 16
        %v827 = vpop.permute.xlu0 %826
        %828 = vrot.lane.b32.xlu0 %v634, 16
        %v829 = vpop.permute.xlu0 %828
        %830 = vrot.lane.b32.xlu0 %v799, 16
        %v831 = vpop.permute.xlu0 %830
        %v832 = vrot.slane %v752, 1
        %v833 = vrot.slane %v787, 1
        %v834 = vsel %vm667, %v832, %v833
        %835 = vrot.lane.b32.xlu0 %v673, 20
        %v836 = vpop.permute.xlu0 %835
        %837 = vrot.lane.b32.xlu0 %v676, 20
        %v838 = vpop.permute.xlu0 %837
        %839 = vrot.lane.b32.xlu0 %v679, 20
        %v840 = vpop.permute.xlu0 %839
        %841 = vrot.lane.b32.xlu0 %v682, 20
        %v842 = vpop.permute.xlu0 %841
        %843 = vrot.lane.b32.xlu0 %v685, 20
        %v844 = vpop.permute.xlu0 %843
        %845 = vrot.lane.b32.xlu0 %v688, 20
        %v846 = vpop.permute.xlu0 %845
        %847 = vrot.lane.b32.xlu0 %v691, 20
        %v848 = vpop.permute.xlu0 %847
        %849 = vrot.lane.b32.xlu0 %v694, 20
        %v850 = vpop.permute.xlu0 %849
        %851 = vrot.lane.b32.xlu0 %v697, 20
        %v852 = vpop.permute.xlu0 %851
        %853 = vrot.lane.b32.xlu0 %v700, 20
        %v854 = vpop.permute.xlu0 %853
        %855 = vrot.lane.b32.xlu0 %v703, 20
        %v856 = vpop.permute.xlu0 %855
        %857 = vrot.lane.b32.xlu0 %v706, 20
        %v858 = vpop.permute.xlu0 %857
        %859 = vrot.lane.b32.xlu0 %v709, 20
        %v860 = vpop.permute.xlu0 %859
        %861 = vrot.lane.b32.xlu0 %v712, 20
        %v862 = vpop.permute.xlu0 %861
        %863 = vrot.lane.b32.xlu0 %v715, 20
        %v864 = vpop.permute.xlu0 %863
        %865 = vrot.lane.b32.xlu0 %v834, 20
        %v866 = vpop.permute.xlu0 %865
        %v869 = vunpack.c.l.b16 %v311
        %v870 = vunpack.c.l.b16 %v312
        %v871 = vpack.c.b16 %v870, %v869
        %872 = vrot.lane.b32.xlu0 %v380, 24
        %v873 = vpop.permute.xlu0 %872
        %874 = vrot.lane.b32.xlu0 %v381, 24
        %v875 = vpop.permute.xlu0 %874
        %876 = vrot.lane.b32.xlu0 %v382, 24
        %v877 = vpop.permute.xlu0 %876
        %878 = vrot.lane.b32.xlu0 %v383, 24
        %v879 = vpop.permute.xlu0 %878
        %880 = vrot.lane.b32.xlu0 %v384, 24
        %v881 = vpop.permute.xlu0 %880
        %882 = vrot.lane.b32.xlu0 %v385, 24
        %v883 = vpop.permute.xlu0 %882
        %884 = vrot.lane.b32.xlu0 %v386, 24
        %v885 = vpop.permute.xlu0 %884
        %886 = vrot.lane.b32.xlu0 %v387, 24
        %v887 = vpop.permute.xlu0 %886
        %888 = vrot.lane.b32.xlu0 %v388, 24
        %v889 = vpop.permute.xlu0 %888
        %890 = vrot.lane.b32.xlu0 %v389, 24
        %v891 = vpop.permute.xlu0 %890
        %892 = vrot.lane.b32.xlu0 %v390, 24
        %v893 = vpop.permute.xlu0 %892
        %894 = vrot.lane.b32.xlu0 %v391, 24
        %v895 = vpop.permute.xlu0 %894
        %896 = vrot.lane.b32.xlu0 %v392, 24
        %v897 = vpop.permute.xlu0 %896
        %898 = vrot.lane.b32.xlu0 %v393, 24
        %v899 = vpop.permute.xlu0 %898
        %900 = vrot.lane.b32.xlu0 %v752, 24
        %v901 = vpop.permute.xlu0 %900
        %902 = vrot.lane.b32.xlu0 %v871, 24
        %v903 = vpop.permute.xlu0 %902
        %v905 = vunpack.c.l.b16 %v313
        %v906 = vpack.c.b16 %v905, %v905
        %v908 = vshrl.u32 %v871, 16
        %v910 = vshll.u32 %v871, 16
        %v912 = vrot.slane %v910, 1
        %v913 = vor.u32 %v908, %v912
        %v915 = vshll.u32 %v906, 16
        %v917 = vrot.slane %v915, 1
        %v918 = vsel %vm442, %v913, %v917
        %919 = vrot.lane.b32.xlu0 %v478, 28
        %v920 = vpop.permute.xlu0 %919
        %921 = vrot.lane.b32.xlu0 %v490, 28
        %v922 = vpop.permute.xlu0 %921
        %923 = vrot.lane.b32.xlu0 %v502, 28
        %v924 = vpop.permute.xlu0 %923
        %925 = vrot.lane.b32.xlu0 %v514, 28
        %v926 = vpop.permute.xlu0 %925
        %927 = vrot.lane.b32.xlu0 %v526, 28
        %v928 = vpop.permute.xlu0 %927
        %929 = vrot.lane.b32.xlu0 %v538, 28
        %v930 = vpop.permute.xlu0 %929
        %931 = vrot.lane.b32.xlu0 %v550, 28
        %v932 = vpop.permute.xlu0 %931
        %933 = vrot.lane.b32.xlu0 %v562, 28
        %v934 = vpop.permute.xlu0 %933
        %935 = vrot.lane.b32.xlu0 %v574, 28
        %v936 = vpop.permute.xlu0 %935
        %937 = vrot.lane.b32.xlu0 %v586, 28
        %v938 = vpop.permute.xlu0 %937
        %939 = vrot.lane.b32.xlu0 %v598, 28
        %v940 = vpop.permute.xlu0 %939
        %941 = vrot.lane.b32.xlu0 %v610, 28
        %v942 = vpop.permute.xlu0 %941
        %943 = vrot.lane.b32.xlu0 %v622, 28
        %v944 = vpop.permute.xlu0 %943
        %945 = vrot.lane.b32.xlu0 %v634, 28
        %v946 = vpop.permute.xlu0 %945
        %947 = vrot.lane.b32.xlu0 %v799, 28
        %v948 = vpop.permute.xlu0 %947
        %949 = vrot.lane.b32.xlu0 %v918, 28
        %v950 = vpop.permute.xlu0 %949
        %v951 = vrot.slane %v871, 1
        %v952 = vrot.slane %v906, 1
        %v953 = vsel %vm667, %v951, %v952
        %954 = vrot.lane.b32.xlu0 %v676, 32
        %v955 = vpop.permute.xlu0 %954
        %956 = vrot.lane.b32.xlu0 %v679, 32
        %v957 = vpop.permute.xlu0 %956
        %958 = vrot.lane.b32.xlu0 %v682, 32
        %v959 = vpop.permute.xlu0 %958
        %960 = vrot.lane.b32.xlu0 %v685, 32
        %v961 = vpop.permute.xlu0 %960
        %962 = vrot.lane.b32.xlu0 %v688, 32
        %v963 = vpop.permute.xlu0 %962
        %964 = vrot.lane.b32.xlu0 %v691, 32
        %v965 = vpop.permute.xlu0 %964
        %966 = vrot.lane.b32.xlu0 %v694, 32
        %v967 = vpop.permute.xlu0 %966
        %968 = vrot.lane.b32.xlu0 %v697, 32
        %v969 = vpop.permute.xlu0 %968
        %970 = vrot.lane.b32.xlu0 %v700, 32
        %v971 = vpop.permute.xlu0 %970
        %972 = vrot.lane.b32.xlu0 %v703, 32
        %v973 = vpop.permute.xlu0 %972
        %974 = vrot.lane.b32.xlu0 %v706, 32
        %v975 = vpop.permute.xlu0 %974
        %976 = vrot.lane.b32.xlu0 %v709, 32
        %v977 = vpop.permute.xlu0 %976
        %978 = vrot.lane.b32.xlu0 %v712, 32
        %v979 = vpop.permute.xlu0 %978
        %980 = vrot.lane.b32.xlu0 %v715, 32
        %v981 = vpop.permute.xlu0 %980
        %982 = vrot.lane.b32.xlu0 %v834, 32
        %v983 = vpop.permute.xlu0 %982
        %984 = vrot.lane.b32.xlu0 %v953, 32
        %v985 = vpop.permute.xlu0 %984
        %vm986 = vcmask 31744
        %v988 = vsel %vm986, %v378, %v636
        %v990 = vsel %vm986, %v379, %v638
        %v992 = vsel %vm986, %v380, %v640
        %v994 = vsel %vm986, %v381, %v642
        %v996 = vsel %vm986, %v382, %v644
        %v998 = vsel %vm986, %v383, %v646
        %v1000 = vsel %vm986, %v384, %v648
        %v1002 = vsel %vm986, %v385, %v650
        %v1004 = vsel %vm986, %v386, %v652
        %v1006 = vsel %vm986, %v387, %v654
        %v1008 = vsel %vm986, %v388, %v656
        %v1010 = vsel %vm986, %v389, %v658
        %v1012 = vsel %vm986, %v390, %v660
        %v1014 = vsel %vm986, %v391, %v662
        %v1016 = vsel %vm986, %v392, %v664
        %v1018 = vsel %vm986, %v393, %v666
        %vm1019 = vcmask 64512
        %v1021 = vsel %vm1019, %v988, %v717
        %v1023 = vsel %vm1019, %v990, %v719
        %v1025 = vsel %vm1019, %v992, %v721
        %v1027 = vsel %vm1019, %v994, %v723
        %v1029 = vsel %vm1019, %v996, %v725
        %v1031 = vsel %vm1019, %v998, %v727
        %v1033 = vsel %vm1019, %v1000, %v729
        %v1035 = vsel %vm1019, %v1002, %v731
        %v1037 = vsel %vm1019, %v1004, %v733
        %v1039 = vsel %vm1019, %v1006, %v735
        %v1041 = vsel %vm1019, %v1008, %v737
        %v1043 = vsel %vm1019, %v1010, %v739
        %v1045 = vsel %vm1019, %v1012, %v741
        %v1047 = vsel %vm1019, %v1014, %v743
        %v1049 = vsel %vm1019, %v1016, %v745
        %v1051 = vsel %vm1019, %v1018, %v747
        %vm1052 = vcmask 97280
        %v1054 = vsel %vm1052, %v1021, %v754
        %v1056 = vsel %vm1052, %v1023, %v756
        %v1058 = vsel %vm1052, %v1025, %v758
        %v1060 = vsel %vm1052, %v1027, %v760
        %v1062 = vsel %vm1052, %v1029, %v762
        %v1064 = vsel %vm1052, %v1031, %v764
        %v1066 = vsel %vm1052, %v1033, %v766
        %v1068 = vsel %vm1052, %v1035, %v768
        %v1070 = vsel %vm1052, %v1037, %v770
        %v1072 = vsel %vm1052, %v1039, %v772
        %v1074 = vsel %vm1052, %v1041, %v774
        %v1076 = vsel %vm1052, %v1043, %v776
        %v1078 = vsel %vm1052, %v1045, %v778
        %v1080 = vsel %vm1052, %v1047, %v780
        %v1082 = vsel %vm1052, %v1049, %v782
        %v1084 = vsel %vm1052, %v1051, %v784
        %vm1085 = vcmask 130048
        %v1087 = vsel %vm1085, %v1054, %v801
        %v1089 = vsel %vm1085, %v1056, %v803
        %v1091 = vsel %vm1085, %v1058, %v805
        %v1093 = vsel %vm1085, %v1060, %v807
        %v1095 = vsel %vm1085, %v1062, %v809
        %v1097 = vsel %vm1085, %v1064, %v811
        %v1099 = vsel %vm1085, %v1066, %v813
        %v1101 = vsel %vm1085, %v1068, %v815
        %v1103 = vsel %vm1085, %v1070, %v817
        %v1105 = vsel %vm1085, %v1072, %v819
        %v1107 = vsel %vm1085, %v1074, %v821
        %v1109 = vsel %vm1085, %v1076, %v823
        %v1111 = vsel %vm1085, %v1078, %v825
        %v1113 = vsel %vm1085, %v1080, %v827
        %v1115 = vsel %vm1085, %v1082, %v829
        %v1117 = vsel %vm1085, %v1084, %v831
        %vm1118 = vcmask 162816
        %v1120 = vsel %vm1118, %v1087, %v836
        %v1122 = vsel %vm1118, %v1089, %v838
        %v1124 = vsel %vm1118, %v1091, %v840
        %v1126 = vsel %vm1118, %v1093, %v842
        %v1128 = vsel %vm1118, %v1095, %v844
        %v1130 = vsel %vm1118, %v1097, %v846
        %v1132 = vsel %vm1118, %v1099, %v848
        %v1134 = vsel %vm1118, %v1101, %v850
        %v1136 = vsel %vm1118, %v1103, %v852
        %v1138 = vsel %vm1118, %v1105, %v854
        %v1140 = vsel %vm1118, %v1107, %v856
        %v1142 = vsel %vm1118, %v1109, %v858
        %v1144 = vsel %vm1118, %v1111, %v860
        %v1146 = vsel %vm1118, %v1113, %v862
        %v1148 = vsel %vm1118, %v1115, %v864
        %v1150 = vsel %vm1118, %v1117, %v866
        %vm1151 = vcmask 195584
        %v1153 = vsel %vm1151, %v1120, %v873
        %v1155 = vsel %vm1151, %v1122, %v875
        %v1157 = vsel %vm1151, %v1124, %v877
        %v1159 = vsel %vm1151, %v1126, %v879
        %v1161 = vsel %vm1151, %v1128, %v881
        %v1163 = vsel %vm1151, %v1130, %v883
        %v1165 = vsel %vm1151, %v1132, %v885
        %v1167 = vsel %vm1151, %v1134, %v887
        %v1169 = vsel %vm1151, %v1136, %v889
        %v1171 = vsel %vm1151, %v1138, %v891
        %v1173 = vsel %vm1151, %v1140, %v893
        %v1175 = vsel %vm1151, %v1142, %v895
        %v1177 = vsel %vm1151, %v1144, %v897
        %v1179 = vsel %vm1151, %v1146, %v899
        %v1181 = vsel %vm1151, %v1148, %v901
        %v1183 = vsel %vm1151, %v1150, %v903
        %vm1184 = vcmask 228352
        %v1186 = vsel %vm1184, %v1153, %v920
        %v1188 = vsel %vm1184, %v1155, %v922
        %v1190 = vsel %vm1184, %v1157, %v924
        %v1192 = vsel %vm1184, %v1159, %v926
        %v1194 = vsel %vm1184, %v1161, %v928
        %v1196 = vsel %vm1184, %v1163, %v930
        %v1198 = vsel %vm1184, %v1165, %v932
        %v1200 = vsel %vm1184, %v1167, %v934
        %v1202 = vsel %vm1184, %v1169, %v936
        %v1204 = vsel %vm1184, %v1171, %v938
        %v1206 = vsel %vm1184, %v1173, %v940
        %v1208 = vsel %vm1184, %v1175, %v942
        %v1210 = vsel %vm1184, %v1177, %v944
        %v1212 = vsel %vm1184, %v1179, %v946
        %v1214 = vsel %vm1184, %v1181, %v948
        %v1216 = vsel %vm1184, %v1183, %v950
        %vm1217 = vcmask 261120
        %v1219 = vsel %vm1217, %v1186, %v955
        %v1221 = vsel %vm1217, %v1188, %v957
        %v1223 = vsel %vm1217, %v1190, %v959
        %v1225 = vsel %vm1217, %v1192, %v961
        %v1227 = vsel %vm1217, %v1194, %v963
        %v1229 = vsel %vm1217, %v1196, %v965
        %v1231 = vsel %vm1217, %v1198, %v967
        %v1233 = vsel %vm1217, %v1200, %v969
        %v1235 = vsel %vm1217, %v1202, %v971
        %v1237 = vsel %vm1217, %v1204, %v973
        %v1239 = vsel %vm1217, %v1206, %v975
        %v1241 = vsel %vm1217, %v1208, %v977
        %v1243 = vsel %vm1217, %v1210, %v979
        %v1245 = vsel %vm1217, %v1212, %v981
        %v1247 = vsel %vm1217, %v1214, %v983
        %v1249 = vsel %vm1217, %v1216, %v985
        %v1250 = vld [vmem:[%s1] sm:$0xf]
        %v1251 = vld [vmem:[%s1 + $0x4] sm:$0xf]
        %v1252 = vld [vmem:[%s1 + $0x8] sm:$0xf]
        %v1253 = vld [vmem:[%s1 + $0xc] sm:$0xf]
        %v1254 = vld [vmem:[%s1 + $0x10] sm:$0x3]
        %v1255 = vld [vmem:[%s2] sm:$0x1]
        %v1257 = vlaneseq
        %v1258 = vshrl.u32 %v1257, 7
        %v1259 = vsub.s32 0, %v1258
        %v1260 = vrot.slane %v1255, %v1259
        %v1267 = vunpack.c.l.b16 %v1250
        %v1268 = vunpack.c.l.b16 %v1251
        %v1269 = vunpack.c.l.b16 %v1252
        %v1270 = vunpack.c.l.b16 %v1253
        %v1271 = vunpack.c.l.b16 %v1254
        %v1272 = vpack.c.b16 %v1268, %v1267
        %v1273 = vpack.c.b16 %v1270, %v1269
        %v1274 = vpack.c.b16 %v1271, %v1271
        %vm1277 = vcmask 293888
        %v1278 = vsel %vm1277, %v1219, 0
        %v1280 = vsel %vm1277, %v1221, 0
        %v1282 = vsel %vm1277, %v1223, 0
        %v1284 = vsel %vm1277, %v1225, 0
        %v1286 = vsel %vm1277, %v1227, 0
        %v1288 = vsel %vm1277, %v1229, 0
        %v1290 = vsel %vm1277, %v1231, 0
        %v1292 = vsel %vm1277, %v1233, 0
        %v1294 = vsel %vm1277, %v1235, 0
        %v1296 = vsel %vm1277, %v1237, 0
        %v1298 = vsel %vm1277, %v1239, 0
        %v1300 = vsel %vm1277, %v1241, 0
        %v1302 = vsel %vm1277, %v1243, 0
        %v1304 = vsel %vm1277, %v1245, 0
        %v1306 = vsel %vm1277, %v1247, 0
        %v1308 = vsel %vm1277, %v1249, 0
        %vm1310 = vcmask 1041408
        %v1312 = vsel %vm1310, %v1274, 0
        %1314 = vmatprep.subr.bf16.mxu0 0
        %1315 = vmatpush1.bf16.msra.mxu0 %v1272
        %1316 = vmatprep.subr.bf16.mxu0 0
        %1317 = vmatpush1.bf16.msra.mxu0 %v1273
        %1318 = vmatprep.subr.bf16.mxu0 0
        %1319 = vmatpush1.bf16.msra.mxu0 %v1312
        %1320 = vmatprep.subr.bf16.mxu0 0
        %1321 = vmatpush1.bf16.msra.mxu0 0
        %1322 = vmatprep.subr.bf16.mxu0 0
        %1323 = vmatpush1.bf16.msra.mxu0 0
        %1324 = vmatprep.subr.bf16.mxu0 0
        %1325 = vmatpush1.bf16.msra.mxu0 0
        %1326 = vmatprep.subr.bf16.mxu0 0
        %1327 = vmatpush1.bf16.msra.mxu0 0
        %1328 = vmatprep.subr.bf16.mxu0 0
        %1329 = vmatpush1.bf16.msra.mxu0 0
        %1330 = vmatprep.subr.bf16.mxu0 0
        %1331 = vmatpush1.bf16.msra.mxu0 0
        %1332 = vmatprep.subr.bf16.mxu0 0
        %1333 = vmatpush1.bf16.msra.mxu0 0
        %1334 = vmatprep.subr.bf16.mxu0 0
        %1335 = vmatpush1.bf16.msra.mxu0 0
        %1336 = vmatprep.subr.bf16.mxu0 0
        %1337 = vmatpush1.bf16.msra.mxu0 0
        %1338 = vmatprep.subr.bf16.mxu0 0
        %1339 = vmatpush1.bf16.msra.mxu0 0
        %1340 = vmatprep.subr.bf16.mxu0 0
        %1341 = vmatpush1.bf16.msra.mxu0 0
        %1342 = vmatprep.subr.bf16.mxu0 0
        %1343 = vmatpush1.bf16.msra.mxu0 0
        %1344 = vmatprep.subr.bf16.mxu0 0
        %1345 = vmatpush1.bf16.msra.mxu0 0
        %1346 = vmatprep.mubr.bf16.mxu0 0
        %1347 = vmatmul.mubr.bf16.gmra.mrb[0].mxu0 %v1278
        %v1348 = vpop.f32.mrb[0].mxu0
        %v1349 = vadd.f32 %v1260, %v1348
        %v1350 = vpop.f32.mrb[0].mxu0
        %v1351 = vpop.f32.mrb[0].mxu0
        %v1352 = vadd.f32 %v1260, %v1351
        %v1353 = vpop.f32.mrb[0].mxu0
        %1354 = vmatprep.mubr.bf16.mxu0 0
        %1355 = vmatmul.mubr.bf16.gmra.mrb[0].mxu0 %v1280
        %v1356 = vpop.f32.mrb[0].mxu0
        %v1357 = vadd.f32 %v1260, %v1356
        %v1358 = vpop.f32.mrb[0].mxu0
        %v1359 = vpop.f32.mrb[0].mxu0
        %v1360 = vadd.f32 %v1260, %v1359
        %v1361 = vpop.f32.mrb[0].mxu0
        %1362 = vmatprep.mubr.bf16.mxu0 0
        %1363 = vmatmul.mubr.bf16.gmra.mrb[0].mxu0 %v1282
        %v1364 = vpop.f32.mrb[0].mxu0
        %v1365 = vadd.f32 %v1260, %v1364
        %v1366 = vpop.f32.mrb[0].mxu0
        %v1367 = vpop.f32.mrb[0].mxu0
        %v1368 = vadd.f32 %v1260, %v1367
        %v1369 = vpop.f32.mrb[0].mxu0
        %1370 = vmatprep.mubr.bf16.mxu0 0
        %1371 = vmatmul.mubr.bf16.gmra.mrb[0].mxu0 %v1284
        %v1372 = vpop.f32.mrb[0].mxu0
        %v1373 = vadd.f32 %v1260, %v1372
        %v1374 = vpop.f32.mrb[0].mxu0
        %v1375 = vpop.f32.mrb[0].mxu0
        %v1376 = vadd.f32 %v1260, %v1375
        %v1377 = vpop.f32.mrb[0].mxu0
        %1378 = vmatprep.mubr.bf16.mxu0 0
        %1379 = vmatmul.mubr.bf16.gmra.mrb[0].mxu0 %v1286
        %v1380 = vpop.f32.mrb[0].mxu0
        %v1381 = vadd.f32 %v1260, %v1380
        %v1382 = vpop.f32.mrb[0].mxu0
        %v1383 = vpop.f32.mrb[0].mxu0
        %v1384 = vadd.f32 %v1260, %v1383
        %v1385 = vpop.f32.mrb[0].mxu0
        %1386 = vmatprep.mubr.bf16.mxu0 0
        %1387 = vmatmul.mubr.bf16.gmra.mrb[0].mxu0 %v1288
        %v1388 = vpop.f32.mrb[0].mxu0
        %v1389 = vadd.f32 %v1260, %v1388
        %v1390 = vpop.f32.mrb[0].mxu0
        %v1391 = vpop.f32.mrb[0].mxu0
        %v1392 = vadd.f32 %v1260, %v1391
        %v1393 = vpop.f32.mrb[0].mxu0
        %1394 = vmatprep.mubr.bf16.mxu0 0
        %1395 = vmatmul.mubr.bf16.gmra.mrb[0].mxu0 %v1290
        %v1396 = vpop.f32.mrb[0].mxu0
        %v1397 = vadd.f32 %v1260, %v1396
        %v1398 = vpop.f32.mrb[0].mxu0
        %v1399 = vpop.f32.mrb[0].mxu0
        %v1400 = vadd.f32 %v1260, %v1399
        %v1401 = vpop.f32.mrb[0].mxu0
        %1402 = vmatprep.mubr.bf16.mxu0 0
        %1403 = vmatmul.mubr.bf16.gmra.mrb[0].mxu0 %v1292
        %v1404 = vpop.f32.mrb[0].mxu0
        %v1405 = vadd.f32 %v1260, %v1404
        %v1406 = vpop.f32.mrb[0].mxu0
        %v1407 = vpop.f32.mrb[0].mxu0
        %v1408 = vadd.f32 %v1260, %v1407
        %v1409 = vpop.f32.mrb[0].mxu0
        %1410 = vmatprep.mubr.bf16.mxu0 0
        %1411 = vmatmul.mubr.bf16.gmra.mrb[0].mxu0 %v1294
        %v1412 = vpop.f32.mrb[0].mxu0
        %v1413 = vadd.f32 %v1260, %v1412
        %v1414 = vpop.f32.mrb[0].mxu0
        %v1415 = vpop.f32.mrb[0].mxu0
        %v1416 = vadd.f32 %v1260, %v1415
        %v1417 = vpop.f32.mrb[0].mxu0
        %1418 = vmatprep.mubr.bf16.mxu0 0
        %1419 = vmatmul.mubr.bf16.gmra.mrb[0].mxu0 %v1296
        %v1420 = vpop.f32.mrb[0].mxu0
        %v1421 = vadd.f32 %v1260, %v1420
        %v1422 = vpop.f32.mrb[0].mxu0
        %v1423 = vpop.f32.mrb[0].mxu0
        %v1424 = vadd.f32 %v1260, %v1423
        %v1425 = vpop.f32.mrb[0].mxu0
        %1426 = vmatprep.mubr.bf16.mxu0 0
        %1427 = vmatmul.mubr.bf16.gmra.mrb[0].mxu0 %v1298
        %v1428 = vpop.f32.mrb[0].mxu0
        %v1429 = vadd.f32 %v1260, %v1428
        %v1430 = vpop.f32.mrb[0].mxu0
        %v1431 = vpop.f32.mrb[0].mxu0
        %v1432 = vadd.f32 %v1260, %v1431
        %v1433 = vpop.f32.mrb[0].mxu0
        %1434 = vmatprep.mubr.bf16.mxu0 0
        %1435 = vmatmul.mubr.bf16.gmra.mrb[0].mxu0 %v1300
        %v1436 = vpop.f32.mrb[0].mxu0
        %v1437 = vadd.f32 %v1260, %v1436
        %v1438 = vpop.f32.mrb[0].mxu0
        %v1439 = vpop.f32.mrb[0].mxu0
        %v1440 = vadd.f32 %v1260, %v1439
        %v1441 = vpop.f32.mrb[0].mxu0
        %1442 = vmatprep.mubr.bf16.mxu0 0
        %1443 = vmatmul.mubr.bf16.gmra.mrb[0].mxu0 %v1302
        %v1444 = vpop.f32.mrb[0].mxu0
        %v1445 = vadd.f32 %v1260, %v1444
        %v1446 = vpop.f32.mrb[0].mxu0
        %v1447 = vpop.f32.mrb[0].mxu0
        %v1448 = vadd.f32 %v1260, %v1447
        %v1449 = vpop.f32.mrb[0].mxu0
        %1450 = vmatprep.mubr.bf16.mxu0 0
        %1451 = vmatmul.mubr.bf16.gmra.mrb[0].mxu0 %v1304
        %v1452 = vpop.f32.mrb[0].mxu0
        %v1453 = vadd.f32 %v1260, %v1452
        %v1454 = vpop.f32.mrb[0].mxu0
        %v1455 = vpop.f32.mrb[0].mxu0
        %v1456 = vadd.f32 %v1260, %v1455
        %v1457 = vpop.f32.mrb[0].mxu0
        %1458 = vmatprep.mubr.bf16.mxu0 0
        %1459 = vmatmul.mubr.bf16.gmra.mrb[0].mxu0 %v1306
        %v1460 = vpop.f32.mrb[0].mxu0
        %v1461 = vadd.f32 %v1260, %v1460
        %v1462 = vpop.f32.mrb[0].mxu0
        %v1463 = vpop.f32.mrb[0].mxu0
        %v1464 = vadd.f32 %v1260, %v1463
        %v1465 = vpop.f32.mrb[0].mxu0
        %1466 = vmatprep.mubr.bf16.mxu0 0
        %1467 = vmatmul.mubr.bf16.gmra.mrb[0].mxu0 %v1308
        %v1468 = vpop.f32.mrb[0].mxu0
        %v1469 = vadd.f32 %v1260, %v1468
        %v1470 = vpop.f32.mrb[0].mxu0
        %v1471 = vpop.f32.mrb[0].mxu0
        %v1472 = vadd.f32 %v1260, %v1471
        %v1473 = vpop.f32.mrb[0].mxu0
        %1474 = vdwg.mxu0
        %v1475 = vmax.f32 %v1349, 0.0
        %v1476 = vmax.f32 %v1352, 0.0
        %v1477 = vmax.f32 %v1357, 0.0
        %v1478 = vmax.f32 %v1360, 0.0
        %v1479 = vmax.f32 %v1365, 0.0
        %v1480 = vmax.f32 %v1368, 0.0
        %v1481 = vmax.f32 %v1373, 0.0
        %v1482 = vmax.f32 %v1376, 0.0
        %v1483 = vmax.f32 %v1381, 0.0
        %v1484 = vmax.f32 %v1384, 0.0
        %v1485 = vmax.f32 %v1389, 0.0
        %v1486 = vmax.f32 %v1392, 0.0
        %v1487 = vmax.f32 %v1397, 0.0
        %v1488 = vmax.f32 %v1400, 0.0
        %v1489 = vmax.f32 %v1405, 0.0
        %v1490 = vmax.f32 %v1408, 0.0
        %v1491 = vmax.f32 %v1413, 0.0
        %v1492 = vmax.f32 %v1416, 0.0
        %v1493 = vmax.f32 %v1421, 0.0
        %v1494 = vmax.f32 %v1424, 0.0
        %v1495 = vmax.f32 %v1429, 0.0
        %v1496 = vmax.f32 %v1432, 0.0
        %v1497 = vmax.f32 %v1437, 0.0
        %v1498 = vmax.f32 %v1440, 0.0
        %v1499 = vmax.f32 %v1445, 0.0
        %v1500 = vmax.f32 %v1448, 0.0
        %v1501 = vmax.f32 %v1453, 0.0
        %v1502 = vmax.f32 %v1456, 0.0
        %v1503 = vmax.f32 %v1461, 0.0
        %v1504 = vmax.f32 %v1464, 0.0
        %v1505 = vmax.f32 %v1469, 0.0
        %v1506 = vmax.f32 %v1472, 0.0
        %v1507 = vadd.f32 %v1475, %v1476
        %v1508 = vadd.f32 %v1507, %v1477
        %v1509 = vadd.f32 %v1508, %v1478
        %v1510 = vadd.f32 %v1509, %v1479
        %v1511 = vadd.f32 %v1510, %v1480
        %v1512 = vadd.f32 %v1511, %v1481
        %v1513 = vadd.f32 %v1512, %v1482
        %v1514 = vadd.f32 %v1513, %v1483
        %v1515 = vadd.f32 %v1514, %v1484
        %v1516 = vadd.f32 %v1515, %v1485
        %v1517 = vadd.f32 %v1516, %v1486
        %v1518 = vadd.f32 %v1517, %v1487
        %v1519 = vadd.f32 %v1518, %v1488
        %v1520 = vadd.f32 %v1519, %v1489
        %v1521 = vadd.f32 %v1520, %v1490
        %v1522 = vadd.f32 %v1521, %v1491
        %v1523 = vadd.f32 %v1522, %v1492
        %v1524 = vadd.f32 %v1523, %v1493
        %v1525 = vadd.f32 %v1524, %v1494
        %v1526 = vadd.f32 %v1525, %v1495
        %v1527 = vadd.f32 %v1526, %v1496
        %v1528 = vadd.f32 %v1527, %v1497
        %v1529 = vadd.f32 %v1528, %v1498
        %v1530 = vadd.f32 %v1529, %v1499
        %v1531 = vadd.f32 %v1530, %v1500
        %v1532 = vadd.f32 %v1531, %v1501
        %v1533 = vadd.f32 %v1532, %v1502
        %v1534 = vadd.f32 %v1533, %v1503
        %v1535 = vadd.f32 %v1534, %v1504
        %v1536 = vadd.f32 %v1535, %v1505
        %v1537 = vadd.f32 %v1536, %v1506
        %v1538 = vrot.slane %v1537, 4
        %v1539 = vadd.f32 %v1537, %v1538
        %v1540 = vrot.slane %v1539, 2
        %v1541 = vadd.f32 %v1539, %v1540
        %v1542 = vrot.slane %v1541, 1
        %v1543 = vadd.f32 %v1541, %v1542
        %v1544 = vmul.f32 %v1543, 0.00390625
        %1545 = vst [vmem:[%s253] sm:$0x1] %v1544
        %v1546 = vld [vmem:[%s3] sm:$0xff]
        %v1547 = vld [vmem:[%s3 + $0x8] sm:$0xff]
        %v1548 = vld [vmem:[%s3 + $0x10] sm:$0xff]
        %v1549 = vld [vmem:[%s3 + $0x18] sm:$0xff]
        %v1550 = vld [vmem:[%s3 + $0x20] sm:$0xff]
        %v1551 = vld [vmem:[%s3 + $0x28] sm:$0xff]
        %v1552 = vld [vmem:[%s3 + $0x30] sm:$0xff]
        %v1553 = vld [vmem:[%s3 + $0x38] sm:$0xff]
        %v1554 = vld [vmem:[%s3 + $0x40] sm:$0xff]
        %v1555 = vld [vmem:[%s3 + $0x48] sm:$0xff]
        %v1556 = vld [vmem:[%s3 + $0x50] sm:$0xff]
        %v1557 = vld [vmem:[%s3 + $0x58] sm:$0xff]
        %v1558 = vld [vmem:[%s3 + $0x60] sm:$0xff]
        %v1559 = vld [vmem:[%s3 + $0x68] sm:$0xff]
        %v1560 = vld [vmem:[%s3 + $0x70] sm:$0xff]
        %v1561 = vld [vmem:[%s3 + $0x78] sm:$0xff]
        %v1562 = vld [vmem:[%s4] sm:$0x1]
        %1563 = vmatprep.subr.mxu0 0.0
        %1564 = vmatpush1.msra.mxu0 %v1546
        %1565 = vmatprep.subr.mxu0 0.0
        %1566 = vmatpush1.msra.mxu0 %v1547
        %1567 = vmatprep.subr.mxu0 0.0
        %1568 = vmatpush1.msra.mxu0 %v1548
        %1569 = vmatprep.subr.mxu0 0.0
        %1570 = vmatpush1.msra.mxu0 %v1549
        %1571 = vmatprep.subr.mxu0 0.0
        %1572 = vmatpush1.msra.mxu0 %v1550
        %1573 = vmatprep.subr.mxu0 0.0
        %1574 = vmatpush1.msra.mxu0 %v1551
        %1575 = vmatprep.subr.mxu0 0.0
        %1576 = vmatpush1.msra.mxu0 %v1552
        %1577 = vmatprep.subr.mxu0 0.0
        %1578 = vmatpush1.msra.mxu0 %v1553
        %1579 = vmatprep.subr.mxu0 0.0
        %1580 = vmatpush1.msra.mxu0 %v1554
        %1581 = vmatprep.subr.mxu0 0.0
        %1582 = vmatpush1.msra.mxu0 %v1555
        %1583 = vmatprep.subr.mxu0 0.0
        %1584 = vmatpush1.msra.mxu0 %v1556
        %1585 = vmatprep.subr.mxu0 0.0
        %1586 = vmatpush1.msra.mxu0 %v1557
        %1587 = vmatprep.subr.mxu0 0.0
        %1588 = vmatpush1.msra.mxu0 %v1558
        %1589 = vmatprep.subr.mxu0 0.0
        %1590 = vmatpush1.msra.mxu0 %v1559
        %1591 = vmatprep.subr.mxu0 0.0
        %1592 = vmatpush1.msra.mxu0 %v1560
        %1593 = vmatprep.subr.mxu0 0.0
        %1594 = vmatpush1.msra.mxu0 %v1561
        %1595 = vmatprep.subr.mxu0 0.0
        %1596 = vmatpush1.msra.mxu0 0.0
        %1597 = vmatprep.subr.mxu0 0.0
        %1598 = vmatpush1.msra.mxu0 0.0
        %1599 = vmatprep.subr.mxu0 0.0
        %1600 = vmatpush1.msra.mxu0 0.0
        %1601 = vmatprep.subr.mxu0 0.0
        %1602 = vmatpush1.msra.mxu0 0.0
        %1603 = vmatprep.subr.mxu0 0.0
        %1604 = vmatpush1.msra.mxu0 0.0
        %1605 = vmatprep.subr.mxu0 0.0
        %1606 = vmatpush1.msra.mxu0 0.0
        %1607 = vmatprep.subr.mxu0 0.0
        %1608 = vmatpush1.msra.mxu0 0.0
        %1609 = vmatprep.subr.mxu0 0.0
        %1610 = vmatpush1.msra.mxu0 0.0
        %1611 = vmatprep.subr.mxu0 0.0
        %1612 = vmatpush1.msra.mxu0 0.0
        %1613 = vmatprep.subr.mxu0 0.0
        %1614 = vmatpush1.msra.mxu0 0.0
        %1615 = vmatprep.subr.mxu0 0.0
        %1616 = vmatpush1.msra.mxu0 0.0
        %1617 = vmatprep.subr.mxu0 0.0
        %1618 = vmatpush1.msra.mxu0 0.0
        %1619 = vmatprep.subr.mxu0 0.0
        %1620 = vmatpush1.msra.mxu0 0.0
        %1621 = vmatprep.subr.mxu0 0.0
        %1622 = vmatpush1.msra.mxu0 0.0
        %1623 = vmatprep.subr.mxu0 0.0
        %1624 = vmatpush1.msra.mxu0 0.0
        %1625 = vmatprep.subr.mxu0 0.0
        %1626 = vmatpush1.msra.mxu0 0.0
        %1627 = vmatprep.mubr.f32.mxu0 0.0
        %1628 = vmatmul.mubr.f32.gmra.mrb[0].mxu0 %v1544
        %v1629 = vpop.f32.mrb[0].mxu0
        %v1630 = vadd.f32 %v1562, %v1629
        %v1631 = vpop.f32.mrb[0].mxu0
        %1632 = vdwg.mxu0
        %1633 = vst [vmem:[%s247] sm:$0x1] %v1630
        %s1634 = sand.u32 %s142, 1
        %s1635 = scalar_lea.sflag [#allocation3], %s1634
        %s1636 = sand.u32 %s142, 1
        %s1637 = scalar_lea.vmem [#allocation2], %s1636
        %s1638 = sand.u32 %s168, 1
        %s1639 = scalar_lea.sflag [#allocation5], %s1638
        %s1640 = sand.u32 %s168, 1
        %s1641 = scalar_lea.vmem [#allocation4], %s1640
        // Predicated region
        $region41: #{tpu_custom_call.1} parent=39 // pred_check
          %p1642 = pneg %p152
        $region42: #{tpu_custom_call.1} parent=39 // pred_check_branch
          %1644 = sbr.rel (%p1642) target = $region44
        $region43: #{tpu_custom_call.1} parent=39 // pred_region
          %s1646 = ssub.s32 16, 16
          %1647 = vsyncadd %s1635, %s1646
          %s1648 = smul.addr %s24, 16
          %s1649 = scalar_lea.hbm %s5, %s1648
          %s1651 = sshll.u32 %s1637, 4
          %s1652 = int_to_ptr.vmem [resolvable:$true] %s1651
          %1654 = dma.vmem_to_hbm [thread:$0]  %s1652, 16, %s1649, %s1635
        $region44: #{tpu_custom_call.1} parent=39 // pred_fallthru
          _
        // Predicated region
        $region45: #{tpu_custom_call.1} parent=39 // pred_check
          %p1655 = pneg %p178
        $region46: #{tpu_custom_call.1} parent=39 // pred_check_branch
          %1657 = sbr.rel (%p1655) target = $region48
        $region47: #{tpu_custom_call.1} parent=39 // pred_region
          %s1659 = ssub.s32 16, 16
          %1660 = vsyncadd %s1639, %s1659
          %s1661 = smul.addr %s24, 16
          %s1662 = scalar_lea.hbm %s6, %s1661
          %s1664 = sshll.u32 %s1641, 4
          %s1665 = int_to_ptr.vmem [resolvable:$true] %s1664
          %1667 = dma.vmem_to_hbm [thread:$0]  %s1665, 16, %s1662, %s1639
        $region48: #{tpu_custom_call.1} parent=39 // pred_fallthru
          _
      $region40: #{tpu_custom_call.1} parent=5 // pred_fallthru
        _
      %p1668 = scmp.le.s32.totalorder 2, %s19
      // Predicated region
      $region49: #{tpu_custom_call.1} parent=5 // pred_check
        %p1669 = pneg %p1668
      $region50: #{tpu_custom_call.1} parent=5 // pred_check_branch
        %1671 = sbr.rel (%p1669) target = $region52
      $region51: #{tpu_custom_call.1} parent=5 // pred_region
        %s1672 = ssub.s32 %s19, 2
        // Predicated region
        $region53: #{tpu_custom_call.1} parent=51 // pred_check
          %p1673 = pneg %p158
        $region54: #{tpu_custom_call.1} parent=51 // pred_check_branch
          %1675 = sbr.rel (%p1673) target = $region56
        $region55: #{tpu_custom_call.1} parent=51 // pred_region
          %s1676 = sand.u32 %s143, 1
          %s1677 = scalar_lea.sflag [#allocation3], %s1676
          %s1678 = sand.u32 %s143, 1
          %s1679 = scalar_lea.vmem [#allocation2], %s1678
          %1680 = dma.done %s1677, 16
        $region56: #{tpu_custom_call.1} parent=51 // pred_fallthru
          _
        // Predicated region
        $region57: #{tpu_custom_call.1} parent=51 // pred_check
          %p1681 = pneg %p184
        $region58: #{tpu_custom_call.1} parent=51 // pred_check_branch
          %1683 = sbr.rel (%p1681) target = $region60
        $region59: #{tpu_custom_call.1} parent=51 // pred_region
          %s1684 = sand.u32 %s169, 1
          %s1685 = scalar_lea.sflag [#allocation5], %s1684
          %s1686 = sand.u32 %s169, 1
          %s1687 = scalar_lea.vmem [#allocation4], %s1686
          %1688 = dma.done %s1685, 16
        $region60: #{tpu_custom_call.1} parent=51 // pred_fallthru
          _
      $region52: #{tpu_custom_call.1} parent=5 // pred_fallthru
        _
    $region6: #{tpu_custom_call.1} parent=1 // loop_footer
      %s23 = sadd.s32 1, %s19
    $region7: #{tpu_custom_call.1} parent=1 // loop_footer_branch
      %18 = sbr.rel target = $region3
    $region8: #{tpu_custom_call.1} parent=1 // loop_exit
      _
    %1689 = vsyncpa [#allocation3], 1
    %s1690 = scalar_lea.sflag [#allocation3], 1
    %1691 = vsyncpa %s1690, 1
    %1692 = vsyncpa [#allocation5], 1
    %s1693 = scalar_lea.sflag [#allocation5], 1
    %1694 = vsyncpa %s1693, 1

</llo_original>
